<compile_context>
chip_gen: v7x
topology: tpu7x:2x2x1
jax: 0.10.0
libtpu: 0.0.40
codegen_flags: <defaults>
</compile_context>

<pallas_src>
import jax
import jax.numpy as jnp
from jax import lax
from jax.experimental import pallas as pl
from jax.experimental.pallas import tpu as pltpu

EPS = 1e-5
KH = KW = 3
LANES = 128
# Keep the working set comfortably inside v7x's 64 MiB VMEM (also fine on
# v5e / v6e which have 128 MiB physical VMEM).
VMEM_LIMIT_BYTES = 48 * 1024 * 1024


def _round_up(x, m):
    return ((x + m - 1) // m) * m


def _conv_stats_kernel(x_ref, w_ref, y_ref, stats_ref, xpad_ref):
    # x_ref:     (1, H, W, Cin)      bf16 one batch element (NHWC)
    # w_ref:     (KH*KW*Cin, Cp)     bf16 im2col-ordered weights (Cout padded)
    # y_ref:     (1, H, W, Cp)       f32  conv output (lane-dense channels)
    # stats_ref: (1, 2, Cp)          f32  per-channel [sum, sum_sq] of this image
    # xpad_ref:  (H+2, W+2, Cin)     bf16 VMEM scratch, zero halo (in-kernel pad)
    _, H, W, Cin = x_ref.shape
    Cp = w_ref.shape[1]

    # In-kernel zero padding: avoids materializing a padded copy in HBM.
    xpad_ref[...] = jnp.zeros_like(xpad_ref)
    xpad_ref[1:H + 1, 1:W + 1, :] = x_ref[0]

    # im2col: stack the 9 taps along the channel axis so a single matmul
    # contracts KH*KW*Cin instead of 9 tiny Cin-contraction matmuls.
    cols = [xpad_ref[kh:kh + H, kw:kw + W, :]
            for kh in range(KH) for kw in range(KW)]
    col = jnp.concatenate(cols, axis=-1).reshape(H * W, KH * KW * Cin)

    # One bf16 MXU matmul per image tile, f32 accumulation.
    y = jnp.dot(col, w_ref[...], preferred_element_type=jnp.float32)  # (H*W, Cp)

    y_ref[0] = y.reshape(H, W, Cp).astype(y_ref.dtype)

    # Per-channel partial sums for the batch-norm statistics (f32).
    s1 = jnp.sum(y, axis=0, keepdims=True)
    s2 = jnp.sum(y * y, axis=0, keepdims=True)
    stats_ref[0] = jnp.concatenate([s1, s2], axis=0)


def _bn_apply_kernel(y_ref, scale_ref, shift_ref, out_ref):
    # y_ref / out_ref: (1, h_tile, W, Cp) f32 ; scale/shift: (1, Cp) f32
    Cp = scale_ref.shape[-1]
    scale = scale_ref[...].reshape(1, 1, 1, Cp)
    shift = shift_ref[...].reshape(1, 1, 1, Cp)
    out_ref[...] = (y_ref[...] * scale + shift).astype(out_ref.dtype)


def conv_bn_2d_nhwc(x_nhwc, w_oihw, gamma, beta, *, h_tile=8):
    """ConvBn2d forward in NHWC. Returns (N, H, W, Cout) float32."""
    N, H, W, Cin = x_nhwc.shape
    Cout = w_oihw.shape[0]
    Cp = _round_up(Cout, LANES)          # lane-dense output channels

    # bf16 activations / weights for the MXU (accumulation stays f32).
    x_bf16 = x_nhwc.astype(jnp.bfloat16)
    # OIHW -> (KH*KW*Cin, Cout) im2col order, zero-pad Cout -> Cp.
    w = jnp.transpose(w_oihw, (2, 3, 1, 0)).reshape(KH * KW * Cin, Cout)
    w = jnp.pad(w, ((0, 0), (0, Cp - Cout))).astype(jnp.bfloat16)

    flops = 2 * N * H * W * (KH * KW * Cin) * Cp
    bytes_accessed = (x_bf16.size * 2 + w.size * 2
                      + N * H * W * Cp * 4 + N * 2 * Cp * 4)

    # ---- pass 1: conv (im2col matmul) + per-image channel sum / sum_sq ----
    y, stats = pl.pallas_call(
        _conv_stats_kernel,
        out_shape=(jax.ShapeDtypeStruct((N, H, W, Cp), jnp.float32),
                   jax.ShapeDtypeStruct((N, 2, Cp), jnp.float32)),
        grid_spec=pltpu.PrefetchScalarGridSpec(
            num_scalar_prefetch=0,
            grid=(N,),
            in_specs=[
                pl.BlockSpec((1, H, W, Cin), lambda n: (n, 0, 0, 0)),
                pl.BlockSpec((KH * KW * Cin, Cp), lambda n: (0, 0)),
            ],
            out_specs=[
                pl.BlockSpec((1, H, W, Cp), lambda n: (n, 0, 0, 0)),
                pl.BlockSpec((1, 2, Cp), lambda n: (n, 0, 0)),
            ],
            scratch_shapes=[pltpu.VMEM((H + 2, W + 2, Cin), jnp.bfloat16)],
        ),
        compiler_params=pltpu.CompilerParams(
            dimension_semantics=("parallel",),
            vmem_limit_bytes=VMEM_LIMIT_BYTES),
        cost_estimate=pl.CostEstimate(
            flops=flops, transcendentals=0, bytes_accessed=bytes_accessed),
    )(x_bf16, w)

    # ---- fold training-mode BN into per-channel scale / shift (tiny, XLA) ----
    cnt = jnp.float32(N * H * W)
    tot = jnp.sum(stats, axis=0)                          # (2, Cp) f32
    mean = tot[0] / cnt
    var = jnp.maximum(tot[1] / cnt - mean * mean, 0.0)    # biased batch variance
    inv_std = lax.rsqrt(var + EPS)
    gamma_p = jnp.pad(gamma.astype(jnp.float32), (0, Cp - Cout))
    beta_p = jnp.pad(beta.astype(jnp.float32), (0, Cp - Cout))
    scale_vec = gamma_p * inv_std
    scale = scale_vec.reshape(1, Cp)
    shift = (beta_p - mean * scale_vec).reshape(1, Cp)

    # ---- pass 2: tiled normalize, out = y * scale + shift ----
    ht = h_tile if (H % h_tile == 0) else H
    out_p = pl.pallas_call(
        _bn_apply_kernel,
        out_shape=jax.ShapeDtypeStruct((N, H, W, Cp), jnp.float32),
        grid_spec=pltpu.PrefetchScalarGridSpec(
            num_scalar_prefetch=0,
            grid=(N, H // ht),
            in_specs=[
                pl.BlockSpec((1, ht, W, Cp), lambda n, h: (n, h, 0, 0)),
                pl.BlockSpec((1, Cp), lambda n, h: (0, 0)),
                pl.BlockSpec((1, Cp), lambda n, h: (0, 0)),
            ],
            out_specs=pl.BlockSpec((1, ht, W, Cp), lambda n, h: (n, h, 0, 0)),
        ),
        compiler_params=pltpu.CompilerParams(
            dimension_semantics=("parallel", "parallel"),
            vmem_limit_bytes=VMEM_LIMIT_BYTES),
    )(y, scale, shift)

    return out_p[..., :Cout]             # drop the zero-padded channels


def conv_bn_2d(x_nchw, w_oihw, gamma, beta):
    """PyTorch-layout wrapper: NCHW in / NCHW out. Use conv_bn_2d_nhwc directly
    to skip the two layout transposes when the consumer accepts NHWC."""
    x_nhwc = jnp.transpose(x_nchw, (0, 2, 3, 1))
    out_nhwc = conv_bn_2d_nhwc(x_nhwc, w_oihw, gamma, beta)
    return jnp.transpose(out_nhwc, (0, 3, 1, 2))


def _reference(x_nchw, w_oihw, gamma, beta):
    """Pure-JAX f32 reference (conv + training-mode BN), NCHW."""
    y = lax.conv_general_dilated(
        x_nchw.astype(jnp.float32), w_oihw.astype(jnp.float32),
        window_strides=(1, 1), padding=((1, 1), (1, 1)),
        dimension_numbers=("NCHW", "OIHW", "NCHW"))
    mean = jnp.mean(y, axis=(0, 2, 3), keepdims=True)
    var = jnp.mean((y - mean) ** 2, axis=(0, 2, 3), keepdims=True)
    g = gamma.reshape(1, -1, 1, 1)
    b = beta.reshape(1, -1, 1, 1)
    return (y - mean) * lax.rsqrt(var + EPS) * g + b


if __name__ == "__main__":
    # ConvBn2d(in_channel=4, out_channel=8, kernel_size=3, padding=1, stride=1)
    N, Cin, Cout, H, W = 2, 4, 8, 16, 16

    key = jax.random.PRNGKey(0)
    kx, kw_ = jax.random.split(key)
    x = jax.random.normal(kx, (N, Cin, H, W), dtype=jnp.float32)
    weight = 0.1 * jax.random.normal(kw_, (Cout, Cin, KH, KW), dtype=jnp.float32)
    gamma = jnp.ones((Cout,), jnp.float32)   # BatchNorm2d default init
    beta = jnp.zeros((Cout,), jnp.float32)

    out = jax.block_until_ready(conv_bn_2d(x, weight, gamma, beta))
    assert out.shape == (N, Cout, H, W)

    # The kernel feeds the MXU bf16 inputs (with f32 accumulation and f32 BN
    # statistics), so validate against the f32 reference evaluated on the
    # bf16-quantized inputs.
    xq = x.astype(jnp.bfloat16).astype(jnp.float32)
    wq = weight.astype(jnp.bfloat16).astype(jnp.float32)
    ref = _reference(xq, wq, gamma, beta)
    max_err = float(jnp.max(jnp.abs(out - ref)))
    assert jnp.allclose(out, ref, atol=2e-3, rtol=2e-3), (
        f"mismatch vs reference, max abs err = {max_err}")

    print("KERNEL_OK")
</pallas_src>

<mosaic_0001>
module attributes {stable_mosaic.version = 11 : i64} {
  func.func @_conv_stats_kernel(%arg0: i32, %arg1: memref<1x16x16x4xbf16, #tpu.memory_space<vmem>>, %arg2: memref<36x128xbf16, #tpu.memory_space<vmem>>, %arg3: memref<1x16x16x128xf32, #tpu.memory_space<vmem>>, %arg4: memref<1x2x128xf32, #tpu.memory_space<vmem>>, %arg5: memref<18x18x4xbf16, #tpu.memory_space<vmem>>) attributes {dimension_semantics = [#tpu.dimension_semantics<parallel>], iteration_bounds = array<i64: 2>, scalar_prefetch = 0 : i64, scratch_operands = 1 : i64, tpu.core_type = #tpu.core_type<tc>, window_params = [{transform_indices = @transform_0, window_bounds = array<i64: 1, 16, 16, 4>}, {pipeline_mode = #tpu.pipeline_mode<synchronous>, transform_indices = @transform_1, window_bounds = array<i64: 36, 128>}, {transform_indices = @transform_2, window_bounds = array<i64: 1, 16, 16, 128>}, {transform_indices = @transform_3, window_bounds = array<i64: 1, 2, 128>}]} {
    %cst = arith.constant 0.000000e+00 : bf16
    %0 = vector.broadcast %cst : bf16 to vector<18x18x4xbf16>
    %c0 = arith.constant 0 : index
    %c0_0 = arith.constant 0 : index
    %c0_1 = arith.constant 0 : index
    %1 = vector.load %arg5[%c0, %c0_0, %c0_1] : memref<18x18x4xbf16, #tpu.memory_space<vmem>>, vector<18x18x4xbf16>
    tpu.vector_store %arg5[%c0, %c0_0, %c0_1], %0 {strides = array<i32>} : memref<18x18x4xbf16, #tpu.memory_space<vmem>>, vector<18x18x4xbf16>,
    %c0_2 = arith.constant 0 : index
    %c0_3 = arith.constant 0 : index
    %c0_4 = arith.constant 0 : index
    %c0_5 = arith.constant 0 : index
    %2 = vector.load %arg1[%c0_2, %c0_3, %c0_4, %c0_5] : memref<1x16x16x4xbf16, #tpu.memory_space<vmem>>, vector<1x16x16x4xbf16>
    %3 = vector.shape_cast %2 : vector<1x16x16x4xbf16> to vector<16x16x4xbf16>
    %c1 = arith.constant 1 : index
    %c1_6 = arith.constant 1 : index
    %c0_7 = arith.constant 0 : index
    %4 = vector.load %arg5[%c1, %c1_6, %c0_7] : memref<18x18x4xbf16, #tpu.memory_space<vmem>>, vector<16x16x4xbf16>
    tpu.vector_store %arg5[%c1, %c1_6, %c0_7], %3 {strides = array<i32>} : memref<18x18x4xbf16, #tpu.memory_space<vmem>>, vector<16x16x4xbf16>,
    %c0_8 = arith.constant 0 : index
    %c0_9 = arith.constant 0 : index
    %c0_10 = arith.constant 0 : index
    %5 = vector.load %arg5[%c0_8, %c0_9, %c0_10] : memref<18x18x4xbf16, #tpu.memory_space<vmem>>, vector<16x16x4xbf16>
    %c0_11 = arith.constant 0 : index
    %c1_12 = arith.constant 1 : index
    %c0_13 = arith.constant 0 : index
    %6 = vector.load %arg5[%c0_11, %c1_12, %c0_13] : memref<18x18x4xbf16, #tpu.memory_space<vmem>>, vector<16x16x4xbf16>
    %c0_14 = arith.constant 0 : index
    %c2 = arith.constant 2 : index
    %c0_15 = arith.constant 0 : index
    %7 = vector.load %arg5[%c0_14, %c2, %c0_15] : memref<18x18x4xbf16, #tpu.memory_space<vmem>>, vector<16x16x4xbf16>
    %c1_16 = arith.constant 1 : index
    %c0_17 = arith.constant 0 : index
    %c0_18 = arith.constant 0 : index
    %8 = vector.load %arg5[%c1_16, %c0_17, %c0_18] : memref<18x18x4xbf16, #tpu.memory_space<vmem>>, vector<16x16x4xbf16>
    %c1_19 = arith.constant 1 : index
    %c1_20 = arith.constant 1 : index
    %c0_21 = arith.constant 0 : index
    %9 = vector.load %arg5[%c1_19, %c1_20, %c0_21] : memref<18x18x4xbf16, #tpu.memory_space<vmem>>, vector<16x16x4xbf16>
    %c1_22 = arith.constant 1 : index
    %c2_23 = arith.constant 2 : index
    %c0_24 = arith.constant 0 : index
    %10 = vector.load %arg5[%c1_22, %c2_23, %c0_24] : memref<18x18x4xbf16, #tpu.memory_space<vmem>>, vector<16x16x4xbf16>
    %c2_25 = arith.constant 2 : index
    %c0_26 = arith.constant 0 : index
    %c0_27 = arith.constant 0 : index
    %11 = vector.load %arg5[%c2_25, %c0_26, %c0_27] : memref<18x18x4xbf16, #tpu.memory_space<vmem>>, vector<16x16x4xbf16>
    %c2_28 = arith.constant 2 : index
    %c1_29 = arith.constant 1 : index
    %c0_30 = arith.constant 0 : index
    %12 = vector.load %arg5[%c2_28, %c1_29, %c0_30] : memref<18x18x4xbf16, #tpu.memory_space<vmem>>, vector<16x16x4xbf16>
    %c2_31 = arith.constant 2 : index
    %c2_32 = arith.constant 2 : index
    %c0_33 = arith.constant 0 : index
    %13 = vector.load %arg5[%c2_31, %c2_32, %c0_33] : memref<18x18x4xbf16, #tpu.memory_space<vmem>>, vector<16x16x4xbf16>
    %14 = tpu.concatenate %5, %6, %7, %8, %9, %10, %11, %12, %13 in 2 : vector<16x16x4xbf16>, vector<16x16x4xbf16>, vector<16x16x4xbf16>, vector<16x16x4xbf16>, vector<16x16x4xbf16>, vector<16x16x4xbf16>, vector<16x16x4xbf16>, vector<16x16x4xbf16>, vector<16x16x4xbf16> -> vector<16x16x36xbf16>
    %15 = vector.shape_cast %14 : vector<16x16x36xbf16> to vector<256x36xbf16>
    %c0_34 = arith.constant 0 : index
    %c0_35 = arith.constant 0 : index
    %16 = vector.load %arg2[%c0_34, %c0_35] : memref<36x128xbf16, #tpu.memory_space<vmem>>, vector<36x128xbf16>
    %cst_36 = arith.constant dense<0.000000e+00> : vector<256x128xf32>
    %17 = tpu.matmul %15, %16, %cst_36 {dimension_numbers = #tpu.dot_dimension_numbers<[1], [0], [0], [1], [0, 0, 1, 1], [], []>} : vector<256x36xbf16>, vector<36x128xbf16>, vector<256x128xf32> -> vector<256x128xf32>
    %18 = vector.shape_cast %17 : vector<256x128xf32> to vector<16x16x128xf32>
    %c0_37 = arith.constant 0 : index
    %c0_38 = arith.constant 0 : index
    %c0_39 = arith.constant 0 : index
    %c0_40 = arith.constant 0 : index
    %19 = vector.load %arg3[%c0_37, %c0_38, %c0_39, %c0_40] : memref<1x16x16x128xf32, #tpu.memory_space<vmem>>, vector<1x16x16x128xf32>
    %20 = vector.shape_cast %19 : vector<1x16x16x128xf32> to vector<16x16x128xf32>
    %21 = vector.shape_cast %18 : vector<16x16x128xf32> to vector<1x16x16x128xf32>
    tpu.vector_store %arg3[%c0_37, %c0_38, %c0_39, %c0_40], %21 {strides = array<i32>} : memref<1x16x16x128xf32, #tpu.memory_space<vmem>>, vector<1x16x16x128xf32>,
    %cst_41 = arith.constant dense<0.000000e+00> : vector<128xf32>
    %22 = vector.multi_reduction <add>, %17, %cst_41 [0] : vector<256x128xf32> to vector<128xf32>
    %23 = vector.shape_cast %22 : vector<128xf32> to vector<1x128xf32>
    %24 = arith.mulf %17, %17 : vector<256x128xf32>
    %cst_42 = arith.constant dense<0.000000e+00> : vector<128xf32>
    %25 = vector.multi_reduction <add>, %24, %cst_42 [0] : vector<256x128xf32> to vector<128xf32>
    %26 = vector.shape_cast %25 : vector<128xf32> to vector<1x128xf32>
    %27 = tpu.concatenate %23, %26 in 0 : vector<1x128xf32>, vector<1x128xf32> -> vector<2x128xf32>
    %c0_43 = arith.constant 0 : index
    %c0_44 = arith.constant 0 : index
    %c0_45 = arith.constant 0 : index
    %28 = vector.load %arg4[%c0_43, %c0_44, %c0_45] : memref<1x2x128xf32, #tpu.memory_space<vmem>>, vector<1x2x128xf32>
    %29 = vector.shape_cast %28 : vector<1x2x128xf32> to vector<2x128xf32>
    %30 = vector.shape_cast %27 : vector<2x128xf32> to vector<1x2x128xf32>
    tpu.vector_store %arg4[%c0_43, %c0_44, %c0_45], %30 {strides = array<i32>} : memref<1x2x128xf32, #tpu.memory_space<vmem>>, vector<1x2x128xf32>,
    return
  }
  func.func @transform_0(%arg0: i32) -> (i32, i32, i32, i32) {
    %c0_i32 = arith.constant 0 : i32
    %c0_i32_0 = arith.constant 0 : i32
    %c0_i32_1 = arith.constant 0 : i32
    %c0_i32_2 = arith.constant 0 : i32
    return %arg0, %c0_i32, %c0_i32_0, %c0_i32_1 : i32, i32, i32, i32
  }
  func.func @transform_1(%arg0: i32) -> (i32, i32) {
    %c0_i32 = arith.constant 0 : i32
    %c0_i32_0 = arith.constant 0 : i32
    %c0_i32_1 = arith.constant 0 : i32
    return %c0_i32, %c0_i32_0 : i32, i32
  }
  func.func @transform_2(%arg0: i32) -> (i32, i32, i32, i32) {
    %c0_i32 = arith.constant 0 : i32
    %c0_i32_0 = arith.constant 0 : i32
    %c0_i32_1 = arith.constant 0 : i32
    %c0_i32_2 = arith.constant 0 : i32
    return %arg0, %c0_i32, %c0_i32_0, %c0_i32_1 : i32, i32, i32, i32
  }
  func.func @transform_3(%arg0: i32) -> (i32, i32, i32) {
    %c0_i32 = arith.constant 0 : i32
    %c0_i32_0 = arith.constant 0 : i32
    %c0_i32_1 = arith.constant 0 : i32
    return %arg0, %c0_i32, %c0_i32_0 : i32, i32, i32
  }
}

</mosaic_0001>

<llo_original>
// kernel: tpu_custom_call.1
$region0: #{tpu_custom_call.1}
  #allocation0 [shape = 'u32[]', space=smem, size = 0x4, offset = 0x4, fixed_abs, tag = 'smem constant byte address 0x4 - core index']
  #allocation1 [shape = 'u32[144,128]{1,0:T(1,128)}', space=vmem, size = 0x12000, scoped, tag = 'internal scratch']
  #allocation2 [shape = 'bf16[18,18,4]{2,1,0:T(8,128)(2,1)}', space=vmem, size = 0x1b000, scoped, tag = 'scratch operand']
  %s0 = inlined_call_operand.vmem [shape: bf16[2,16,16,4], index: 0, kind: input, shape index: {}]
  %s1 = inlined_call_operand.vmem [shape: bf16[36,128], index: 1, kind: input, shape index: {}]
  %s2 = inlined_call_operand.hbm [shape: f32[2,16,16,128], index: 2, kind: output, shape index: {0}]
  %s3 = inlined_call_operand.hbm [shape: f32[2,2,128], index: 3, kind: output, shape index: {1}]
  %4 = xla_tuple %s2, %s3
  %s5 = sld [smem:[#allocation0]]
  $region49: #{tpu_custom_call.1} parent=0
    _
  %s7 = ssub.s32 1, %s5
  %s8 = scalar_select 0, %s7, %s5
  $region1: #{tpu_custom_call.1} parent=0
    #allocation3 [shape = 'u8[262144]{0}', space=vmem, size = 0x40000, scoped, tag = 'output window, operand 0']
    #allocation4 [shape = 's32[2]{0}', space=sflag, size = 0x8, scoped, tag = 'scoped memory for tpu_custom_call.1']
    #allocation5 [shape = 'u8[2048]{0}', space=vmem, size = 0x800, scoped, tag = 'output window, operand 1']
    #allocation6 [shape = 's32[2]{0}', space=sflag, size = 0x8, scoped, tag = 'scoped memory for tpu_custom_call.1']
    %9 = vsyncpa [#allocation4], 0
    %s10 = scalar_lea.sflag [#allocation4], 1
    %11 = vsyncpa %s10, 0
    %12 = vsyncpa [#allocation6], 0
    %s13 = scalar_lea.sflag [#allocation6], 1
    %14 = vsyncpa %s13, 0
    loop: start=0, step=1, limit=4
    $region2: #{tpu_custom_call.1} parent=1 // loop_pre_header
      _
    $region3: #{tpu_custom_call.1} parent=1 // loop_header
      %s16 = sphi 0, %s20
      %p17 = scmp.ge.s32.totalorder %s16, 4
      %s26 = sphi 0, %s28
      %s29 = sphi 0, %s26
      %s30 = sphi 0, %s29
      %s46 = sphi 0, %s30
      %s50 = sphi 0, %s50
      %s52 = sphi 0, %s50
      %s53 = sphi 0, %s52
      %s67 = sphi 0, %s53
      %s73 = sphi 0, %s75
      %s76 = sphi 0, %s73
      %s77 = sphi 0, %s76
      %s93 = sphi 0, %s77
      %s99 = sphi 0, %s101
      %s102 = sphi 0, %s99
      %s103 = sphi 0, %s102
      %s119 = sphi 0, %s103
    $region4: #{tpu_custom_call.1} parent=1 // loop_header_branch
      %19 = sbr.rel (%p17) target = $region8
    $region5: #{tpu_custom_call.1} parent=1 // loop_body
      %s21 = ssub.s32 %s16, 1
      %s22 = ssub.s32 %s16, 2
      %s23 = sadd.s32 %s16, 1
      %s24 = ssub.s32 %s16, %s23
      %p25 = scmp.eq.s32.totalorder %s24, 0
      %s27 = sadd.s32 %s26, 1
      %s28 = scalar_select %p25, %s26, %s27
      %p31 = pneg %p25
      %p32 = scmp.eq.s32.totalorder %s16, 1
      %p33 = por %p31, %p32
      %p34 = scmp.ne.s32.totalorder %s26, %s29
      %p35 = scmp.eq.s32.totalorder %s16, 0
      %p36 = por %p34, %p35
      %p37 = scmp.ne.s32.totalorder %s26, %s29
      %p38 = scmp.eq.s32.totalorder %s21, 1
      %p39 = por %p37, %p38
      %p40 = scmp.ne.s32.totalorder %s29, %s30
      %p41 = scmp.eq.s32.totalorder %s21, 0
      %p42 = por %p40, %p41
      %p43 = scmp.ne.s32.totalorder %s29, %s30
      %p44 = scmp.eq.s32.totalorder %s22, 1
      %p45 = por %p43, %p44
      %p47 = scmp.ne.s32.totalorder %s30, %s46
      %p48 = scmp.eq.s32.totalorder %s22, 0
      %p49 = por %p47, %p48
      %s51 = sadd.s32 %s50, 1
      %p54 = scmp.eq.s32.totalorder %s16, 1
      %p55 = scmp.ne.s32.totalorder %s50, %s52
      %p56 = scmp.eq.s32.totalorder %s16, 0
      %p57 = por %p55, %p56
      %p58 = scmp.ne.s32.totalorder %s50, %s52
      %p59 = scmp.eq.s32.totalorder %s21, 1
      %p60 = por %p58, %p59
      %p61 = scmp.ne.s32.totalorder %s52, %s53
      %p62 = scmp.eq.s32.totalorder %s21, 0
      %p63 = por %p61, %p62
      %p64 = scmp.ne.s32.totalorder %s52, %s53
      %p65 = scmp.eq.s32.totalorder %s22, 1
      %p66 = por %p64, %p65
      %p68 = scmp.ne.s32.totalorder %s53, %s67
      %p69 = scmp.eq.s32.totalorder %s22, 0
      %p70 = por %p68, %p69
      %s71 = ssub.s32 %s16, %s23
      %p72 = scmp.eq.s32.totalorder %s71, 0
      %s74 = sadd.s32 %s73, 1
      %s75 = scalar_select %p72, %s73, %s74
      %p78 = pneg %p72
      %p79 = scmp.eq.s32.totalorder %s16, 1
      %p80 = por %p78, %p79
      %p81 = scmp.ne.s32.totalorder %s73, %s76
      %p82 = scmp.eq.s32.totalorder %s16, 0
      %p83 = por %p81, %p82
      %p84 = scmp.ne.s32.totalorder %s73, %s76
      %p85 = scmp.eq.s32.totalorder %s21, 1
      %p86 = por %p84, %p85
      %p87 = scmp.ne.s32.totalorder %s76, %s77
      %p88 = scmp.eq.s32.totalorder %s21, 0
      %p89 = por %p87, %p88
      %p90 = scmp.ne.s32.totalorder %s76, %s77
      %p91 = scmp.eq.s32.totalorder %s22, 1
      %p92 = por %p90, %p91
      %p94 = scmp.ne.s32.totalorder %s77, %s93
      %p95 = scmp.eq.s32.totalorder %s22, 0
      %p96 = por %p94, %p95
      %s97 = ssub.s32 %s16, %s23
      %p98 = scmp.eq.s32.totalorder %s97, 0
      %s100 = sadd.s32 %s99, 1
      %s101 = scalar_select %p98, %s99, %s100
      %p104 = pneg %p98
      %p105 = scmp.eq.s32.totalorder %s16, 1
      %p106 = por %p104, %p105
      %p107 = scmp.ne.s32.totalorder %s99, %s102
      %p108 = scmp.eq.s32.totalorder %s16, 0
      %p109 = por %p107, %p108
      %p110 = scmp.ne.s32.totalorder %s99, %s102
      %p111 = scmp.eq.s32.totalorder %s21, 1
      %p112 = por %p110, %p111
      %p113 = scmp.ne.s32.totalorder %s102, %s103
      %p114 = scmp.eq.s32.totalorder %s21, 0
      %p115 = por %p113, %p114
      %p116 = scmp.ne.s32.totalorder %s102, %s103
      %p117 = scmp.eq.s32.totalorder %s22, 1
      %p118 = por %p116, %p117
      %p120 = scmp.ne.s32.totalorder %s103, %s119
      %p121 = scmp.eq.s32.totalorder %s22, 0
      %p122 = por %p120, %p121
      %p123 = scmp.le.s32.totalorder 1, %s16
      %p124 = scmp.lt.s32.totalorder %s16, 3
      %p125 = pnand %p123, %p124
      %p126 = pneg %p125
      // Predicated region
      $region9: #{tpu_custom_call.1} parent=5 // pred_check
        _
      $region10: #{tpu_custom_call.1} parent=5 // pred_check_branch
        %128 = sbr.rel (%p125) target = $region12
      $region11: #{tpu_custom_call.1} parent=5 // pred_region
        %s129 = ssub.s32 %s16, 1
        // Predicated region
        $region13: #{tpu_custom_call.1} parent=11 // pred_check
          %p130 = pneg %p63
        $region14: #{tpu_custom_call.1} parent=11 // pred_check_branch
          %132 = sbr.rel (%p130) target = $region16
        $region15: #{tpu_custom_call.1} parent=11 // pred_region
          _
        $region16: #{tpu_custom_call.1} parent=11 // pred_fallthru
          _
      $region12: #{tpu_custom_call.1} parent=5 // pred_fallthru
        _
      %p133 = scmp.lt.s32.totalorder %s16, 2
      // Predicated region
      $region17: #{tpu_custom_call.1} parent=5 // pred_check
        %p134 = pneg %p133
      $region18: #{tpu_custom_call.1} parent=5 // pred_check_branch
        %136 = sbr.rel (%p134) target = $region20
      $region19: #{tpu_custom_call.1} parent=5 // pred_region
        // Predicated region
        $region21: #{tpu_custom_call.1} parent=19 // pred_check
          %p137 = pneg %p36
        $region22: #{tpu_custom_call.1} parent=19 // pred_check_branch
          %139 = sbr.rel (%p137) target = $region24
        $region23: #{tpu_custom_call.1} parent=19 // pred_region
          %p140 = scmp.lt.s32.totalorder %s16, 1
          %s141 = scalar_select %p140, %s16, 1
          %s142 = smul.addr %s141, 32
          %s143 = smul.addr %s142, 4
          %s144 = scalar_lea.vmem %s0, %s143
        $region24: #{tpu_custom_call.1} parent=19 // pred_fallthru
          _
      $region20: #{tpu_custom_call.1} parent=5 // pred_fallthru
        _
      %p145 = scmp.le.s32.totalorder 1, %s16
      %p146 = scmp.lt.s32.totalorder %s16, 3
      %p147 = pnand %p145, %p146
      %p148 = pneg %p147
      // Predicated region
      $region25: #{tpu_custom_call.1} parent=5 // pred_check
        _
      $region26: #{tpu_custom_call.1} parent=5 // pred_check_branch
        %150 = sbr.rel (%p147) target = $region28
      $region27: #{tpu_custom_call.1} parent=5 // pred_region
        %s151 = ssub.s32 %s16, 1
        %p152 = scmp.lt.s32.totalorder %s21, 1
        %s153 = scalar_select %p152, %s21, 1
        %s154 = smul.addr %s153, 32
        %s155 = smul.addr %s154, 4
        %s156 = scalar_lea.vmem %s0, %s155
        %p157 = pneg %p42
        %p158 = pneg %p39
        %p159 = pneg %p63
        %p160 = pneg %p60
        %p161 = pneg %p89
        %p162 = pneg %p86
        %s163 = sand.u32 %s76, 1
        %s164 = scalar_lea.sflag [#allocation4], %s163
        %s165 = sand.u32 %s76, 1
        %s166 = smul.addr %s165, 256
        %s167 = scalar_lea.vmem [#allocation3], %s166
        %p168 = pneg %p115
        %p169 = pneg %p112
        %s170 = sand.u32 %s102, 1
        %s171 = scalar_lea.sflag [#allocation6], %s170
        %s172 = sand.u32 %s102, 1
        %s173 = smul.addr %s172, 2
        %s174 = scalar_lea.vmem [#allocation5], %s173
        %p175 = scmp.lt.s32.totalorder %s21, 1
        %s176 = scalar_select %p175, %s21, 1
        %s177 = smul.addr %s176, 32
        %s178 = smul.addr %s177, 4
        %s179 = scalar_lea.vmem %s0, %s178
        %vm181 = vcmask 27648
        %182 = vst.msk [vmem:[#allocation2] sm:$0xf] %vm181, 0
        %183 = vst.msk [vmem:[#allocation2 + $0x4] sm:$0xf] %vm181, 0
        %vm184 = vcmask 24576
        %185 = vst.msk [vmem:[#allocation2 + $0x8] sm:$0x1] %vm184, 0
        %186 = vst.msk [vmem:[#allocation2 + $0xc] sm:$0xf] %vm181, 0
        %187 = vst.msk [vmem:[#allocation2 + $0x10] sm:$0xf] %vm181, 0
        %188 = vst.msk [vmem:[#allocation2 + $0x14] sm:$0x1] %vm184, 0
        %189 = vst.msk [vmem:[#allocation2 + $0x18] sm:$0xf] %vm181, 0
        %190 = vst.msk [vmem:[#allocation2 + $0x1c] sm:$0xf] %vm181, 0
        %191 = vst.msk [vmem:[#allocation2 + $0x20] sm:$0x1] %vm184, 0
        %192 = vst.msk [vmem:[#allocation2 + $0x24] sm:$0xf] %vm181, 0
        %193 = vst.msk [vmem:[#allocation2 + $0x28] sm:$0xf] %vm181, 0
        %194 = vst.msk [vmem:[#allocation2 + $0x2c] sm:$0x1] %vm184, 0
        %195 = vst.msk [vmem:[#allocation2 + $0x30] sm:$0xf] %vm181, 0
        %196 = vst.msk [vmem:[#allocation2 + $0x34] sm:$0xf] %vm181, 0
        %197 = vst.msk [vmem:[#allocation2 + $0x38] sm:$0x1] %vm184, 0
        %198 = vst.msk [vmem:[#allocation2 + $0x3c] sm:$0xf] %vm181, 0
        %199 = vst.msk [vmem:[#allocation2 + $0x40] sm:$0xf] %vm181, 0
        %200 = vst.msk [vmem:[#allocation2 + $0x44] sm:$0x1] %vm184, 0
        %201 = vst.msk [vmem:[#allocation2 + $0x48] sm:$0xf] %vm181, 0
        %202 = vst.msk [vmem:[#allocation2 + $0x4c] sm:$0xf] %vm181, 0
        %203 = vst.msk [vmem:[#allocation2 + $0x50] sm:$0x1] %vm184, 0
        %204 = vst.msk [vmem:[#allocation2 + $0x54] sm:$0xf] %vm181, 0
        %205 = vst.msk [vmem:[#allocation2 + $0x58] sm:$0xf] %vm181, 0
        %206 = vst.msk [vmem:[#allocation2 + $0x5c] sm:$0x1] %vm184, 0
        %207 = vst.msk [vmem:[#allocation2 + $0x60] sm:$0xf] %vm181, 0
        %208 = vst.msk [vmem:[#allocation2 + $0x64] sm:$0xf] %vm181, 0
        %209 = vst.msk [vmem:[#allocation2 + $0x68] sm:$0x1] %vm184, 0
        %210 = vst.msk [vmem:[#allocation2 + $0x6c] sm:$0xf] %vm181, 0
        %211 = vst.msk [vmem:[#allocation2 + $0x70] sm:$0xf] %vm181, 0
        %212 = vst.msk [vmem:[#allocation2 + $0x74] sm:$0x1] %vm184, 0
        %213 = vst.msk [vmem:[#allocation2 + $0x78] sm:$0xf] %vm181, 0
        %214 = vst.msk [vmem:[#allocation2 + $0x7c] sm:$0xf] %vm181, 0
        %215 = vst.msk [vmem:[#allocation2 + $0x80] sm:$0x1] %vm184, 0
        %216 = vst.msk [vmem:[#allocation2 + $0x84] sm:$0xf] %vm181, 0
        %217 = vst.msk [vmem:[#allocation2 + $0x88] sm:$0xf] %vm181, 0
        %218 = vst.msk [vmem:[#allocation2 + $0x8c] sm:$0x1] %vm184, 0
        %219 = vst.msk [vmem:[#allocation2 + $0x90] sm:$0xf] %vm181, 0
        %220 = vst.msk [vmem:[#allocation2 + $0x94] sm:$0xf] %vm181, 0
        %221 = vst.msk [vmem:[#allocation2 + $0x98] sm:$0x1] %vm184, 0
        %222 = vst.msk [vmem:[#allocation2 + $0x9c] sm:$0xf] %vm181, 0
        %223 = vst.msk [vmem:[#allocation2 + $0xa0] sm:$0xf] %vm181, 0
        %224 = vst.msk [vmem:[#allocation2 + $0xa4] sm:$0x1] %vm184, 0
        %225 = vst.msk [vmem:[#allocation2 + $0xa8] sm:$0xf] %vm181, 0
        %226 = vst.msk [vmem:[#allocation2 + $0xac] sm:$0xf] %vm181, 0
        %227 = vst.msk [vmem:[#allocation2 + $0xb0] sm:$0x1] %vm184, 0
        %228 = vst.msk [vmem:[#allocation2 + $0xb4] sm:$0xf] %vm181, 0
        %229 = vst.msk [vmem:[#allocation2 + $0xb8] sm:$0xf] %vm181, 0
        %230 = vst.msk [vmem:[#allocation2 + $0xbc] sm:$0x1] %vm184, 0
        %231 = vst.msk [vmem:[#allocation2 + $0xc0] sm:$0xf] %vm181, 0
        %232 = vst.msk [vmem:[#allocation2 + $0xc4] sm:$0xf] %vm181, 0
        %233 = vst.msk [vmem:[#allocation2 + $0xc8] sm:$0x1] %vm184, 0
        %234 = vst.msk [vmem:[#allocation2 + $0xcc] sm:$0xf] %vm181, 0
        %235 = vst.msk [vmem:[#allocation2 + $0xd0] sm:$0xf] %vm181, 0
        %236 = vst.msk [vmem:[#allocation2 + $0xd4] sm:$0x1] %vm184, 0
        %v237 = vld [vmem:[%s179] sm:$0xf]
        %v238 = vld [vmem:[%s179 + $0x4] sm:$0xf]
        %v239 = vld [vmem:[%s179 + $0x8] sm:$0xf]
        %v240 = vld [vmem:[%s179 + $0xc] sm:$0xf]
        %v241 = vld [vmem:[%s179 + $0x10] sm:$0xf]
        %v242 = vld [vmem:[%s179 + $0x14] sm:$0xf]
        %v243 = vld [vmem:[%s179 + $0x18] sm:$0xf]
        %v244 = vld [vmem:[%s179 + $0x1c] sm:$0xf]
        %v245 = vld [vmem:[%s179 + $0x20] sm:$0xf]
        %v246 = vld [vmem:[%s179 + $0x24] sm:$0xf]
        %v247 = vld [vmem:[%s179 + $0x28] sm:$0xf]
        %v248 = vld [vmem:[%s179 + $0x2c] sm:$0xf]
        %v249 = vld [vmem:[%s179 + $0x30] sm:$0xf]
        %v250 = vld [vmem:[%s179 + $0x34] sm:$0xf]
        %v251 = vld [vmem:[%s179 + $0x38] sm:$0xf]
        %v252 = vld [vmem:[%s179 + $0x3c] sm:$0xf]
        %v253 = vld [vmem:[%s179 + $0x40] sm:$0xf]
        %v254 = vld [vmem:[%s179 + $0x44] sm:$0xf]
        %v255 = vld [vmem:[%s179 + $0x48] sm:$0xf]
        %v256 = vld [vmem:[%s179 + $0x4c] sm:$0xf]
        %v257 = vld [vmem:[%s179 + $0x50] sm:$0xf]
        %v258 = vld [vmem:[%s179 + $0x54] sm:$0xf]
        %v259 = vld [vmem:[%s179 + $0x58] sm:$0xf]
        %v260 = vld [vmem:[%s179 + $0x5c] sm:$0xf]
        %v261 = vld [vmem:[%s179 + $0x60] sm:$0xf]
        %v262 = vld [vmem:[%s179 + $0x64] sm:$0xf]
        %v263 = vld [vmem:[%s179 + $0x68] sm:$0xf]
        %v264 = vld [vmem:[%s179 + $0x6c] sm:$0xf]
        %v265 = vld [vmem:[%s179 + $0x70] sm:$0xf]
        %v266 = vld [vmem:[%s179 + $0x74] sm:$0xf]
        %v267 = vld [vmem:[%s179 + $0x78] sm:$0xf]
        %v268 = vld [vmem:[%s179 + $0x7c] sm:$0xf]
        %vm269 = vsmask.f32 256
        %vm270 = vsmask.f32 4368
        %vm271 = vmor %vm269, %vm270
        %v273 = vshrl.u32 %v237, 16
        %v275 = vrot.slane %v273, 7
        %v276 = vshll.u32 %v237, 16
        %v278 = vor.u32 %v275, %v276
        %v279 = vrot.slane %v275, 4
        %v281 = vshrl.u32 %v238, 16
        %v283 = vrot.slane %v281, 7
        %v284 = vshll.u32 %v238, 16
        %v286 = vor.u32 %v283, %v284
        %v287 = vsel %vm271, %v279, %v286
        %v288 = vrot.slane %v283, 4
        %v290 = vshrl.u32 %v239, 16
        %v292 = vrot.slane %v290, 7
        %v293 = vshll.u32 %v239, 16
        %v295 = vor.u32 %v292, %v293
        %v296 = vrot.slane %v292, 4
        %v298 = vshrl.u32 %v240, 16
        %v300 = vrot.slane %v298, 7
        %v301 = vshll.u32 %v240, 16
        %v303 = vor.u32 %v300, %v301
        %v304 = vsel %vm271, %v296, %v303
        %v305 = vrot.slane %v300, 4
        %v307 = vshrl.u32 %v241, 16
        %v309 = vrot.slane %v307, 7
        %v310 = vshll.u32 %v241, 16
        %v312 = vor.u32 %v309, %v310
        %v313 = vrot.slane %v309, 4
        %v315 = vshrl.u32 %v242, 16
        %v317 = vrot.slane %v315, 7
        %v318 = vshll.u32 %v242, 16
        %v320 = vor.u32 %v317, %v318
        %v321 = vsel %vm271, %v313, %v320
        %v322 = vrot.slane %v317, 4
        %v324 = vshrl.u32 %v243, 16
        %v326 = vrot.slane %v324, 7
        %v327 = vshll.u32 %v243, 16
        %v329 = vor.u32 %v326, %v327
        %v330 = vrot.slane %v326, 4
        %v332 = vshrl.u32 %v244, 16
        %v334 = vrot.slane %v332, 7
        %v335 = vshll.u32 %v244, 16
        %v337 = vor.u32 %v334, %v335
        %v338 = vsel %vm271, %v330, %v337
        %v339 = vrot.slane %v334, 4
        %v341 = vshrl.u32 %v245, 16
        %v343 = vrot.slane %v341, 7
        %v344 = vshll.u32 %v245, 16
        %v346 = vor.u32 %v343, %v344
        %v347 = vrot.slane %v343, 4
        %v349 = vshrl.u32 %v246, 16
        %v351 = vrot.slane %v349, 7
        %v352 = vshll.u32 %v246, 16
        %v354 = vor.u32 %v351, %v352
        %v355 = vsel %vm271, %v347, %v354
        %v356 = vrot.slane %v351, 4
        %v358 = vshrl.u32 %v247, 16
        %v360 = vrot.slane %v358, 7
        %v361 = vshll.u32 %v247, 16
        %v363 = vor.u32 %v360, %v361
        %v364 = vrot.slane %v360, 4
        %v366 = vshrl.u32 %v248, 16
        %v368 = vrot.slane %v366, 7
        %v369 = vshll.u32 %v248, 16
        %v371 = vor.u32 %v368, %v369
        %v372 = vsel %vm271, %v364, %v371
        %v373 = vrot.slane %v368, 4
        %v375 = vshrl.u32 %v249, 16
        %v377 = vrot.slane %v375, 7
        %v378 = vshll.u32 %v249, 16
        %v380 = vor.u32 %v377, %v378
        %v381 = vrot.slane %v377, 4
        %v383 = vshrl.u32 %v250, 16
        %v385 = vrot.slane %v383, 7
        %v386 = vshll.u32 %v250, 16
        %v388 = vor.u32 %v385, %v386
        %v389 = vsel %vm271, %v381, %v388
        %v390 = vrot.slane %v385, 4
        %v392 = vshrl.u32 %v251, 16
        %v394 = vrot.slane %v392, 7
        %v395 = vshll.u32 %v251, 16
        %v397 = vor.u32 %v394, %v395
        %v398 = vrot.slane %v394, 4
        %v400 = vshrl.u32 %v252, 16
        %v402 = vrot.slane %v400, 7
        %v403 = vshll.u32 %v252, 16
        %v405 = vor.u32 %v402, %v403
        %v406 = vsel %vm271, %v398, %v405
        %v407 = vrot.slane %v402, 4
        %v409 = vshrl.u32 %v253, 16
        %v411 = vrot.slane %v409, 7
        %v412 = vshll.u32 %v253, 16
        %v414 = vor.u32 %v411, %v412
        %v415 = vrot.slane %v411, 4
        %v417 = vshrl.u32 %v254, 16
        %v419 = vrot.slane %v417, 7
        %v420 = vshll.u32 %v254, 16
        %v422 = vor.u32 %v419, %v420
        %v423 = vsel %vm271, %v415, %v422
        %v424 = vrot.slane %v419, 4
        %v426 = vshrl.u32 %v255, 16
        %v428 = vrot.slane %v426, 7
        %v429 = vshll.u32 %v255, 16
        %v431 = vor.u32 %v428, %v429
        %v432 = vrot.slane %v428, 4
        %v434 = vshrl.u32 %v256, 16
        %v436 = vrot.slane %v434, 7
        %v437 = vshll.u32 %v256, 16
        %v439 = vor.u32 %v436, %v437
        %v440 = vsel %vm271, %v432, %v439
        %v441 = vrot.slane %v436, 4
        %v443 = vshrl.u32 %v257, 16
        %v445 = vrot.slane %v443, 7
        %v446 = vshll.u32 %v257, 16
        %v448 = vor.u32 %v445, %v446
        %v449 = vrot.slane %v445, 4
        %v451 = vshrl.u32 %v258, 16
        %v453 = vrot.slane %v451, 7
        %v454 = vshll.u32 %v258, 16
        %v456 = vor.u32 %v453, %v454
        %v457 = vsel %vm271, %v449, %v456
        %v458 = vrot.slane %v453, 4
        %v460 = vshrl.u32 %v259, 16
        %v462 = vrot.slane %v460, 7
        %v463 = vshll.u32 %v259, 16
        %v465 = vor.u32 %v462, %v463
        %v466 = vrot.slane %v462, 4
        %v468 = vshrl.u32 %v260, 16
        %v470 = vrot.slane %v468, 7
        %v471 = vshll.u32 %v260, 16
        %v473 = vor.u32 %v470, %v471
        %v474 = vsel %vm271, %v466, %v473
        %v475 = vrot.slane %v470, 4
        %v477 = vshrl.u32 %v261, 16
        %v479 = vrot.slane %v477, 7
        %v480 = vshll.u32 %v261, 16
        %v482 = vor.u32 %v479, %v480
        %v483 = vrot.slane %v479, 4
        %v485 = vshrl.u32 %v262, 16
        %v487 = vrot.slane %v485, 7
        %v488 = vshll.u32 %v262, 16
        %v490 = vor.u32 %v487, %v488
        %v491 = vsel %vm271, %v483, %v490
        %v492 = vrot.slane %v487, 4
        %v494 = vshrl.u32 %v263, 16
        %v496 = vrot.slane %v494, 7
        %v497 = vshll.u32 %v263, 16
        %v499 = vor.u32 %v496, %v497
        %v500 = vrot.slane %v496, 4
        %v502 = vshrl.u32 %v264, 16
        %v504 = vrot.slane %v502, 7
        %v505 = vshll.u32 %v264, 16
        %v507 = vor.u32 %v504, %v505
        %v508 = vsel %vm271, %v500, %v507
        %v509 = vrot.slane %v504, 4
        %v511 = vshrl.u32 %v265, 16
        %v513 = vrot.slane %v511, 7
        %v514 = vshll.u32 %v265, 16
        %v516 = vor.u32 %v513, %v514
        %v517 = vrot.slane %v513, 4
        %v519 = vshrl.u32 %v266, 16
        %v521 = vrot.slane %v519, 7
        %v522 = vshll.u32 %v266, 16
        %v524 = vor.u32 %v521, %v522
        %v525 = vsel %vm271, %v517, %v524
        %v526 = vrot.slane %v521, 4
        %v528 = vshrl.u32 %v267, 16
        %v530 = vrot.slane %v528, 7
        %v531 = vshll.u32 %v267, 16
        %v533 = vor.u32 %v530, %v531
        %v534 = vrot.slane %v530, 4
        %v536 = vshrl.u32 %v268, 16
        %v538 = vrot.slane %v536, 7
        %v539 = vshll.u32 %v268, 16
        %v541 = vor.u32 %v538, %v539
        %v542 = vsel %vm271, %v534, %v541
        %v543 = vrot.slane %v538, 4
        %s592 = scalar_lea.vmem [#allocation2], 12
        %vm593 = vcmask 27648
        %vm594 = vsmask.f32 7938
        %vm595 = vmand %vm593, %vm594
        %v596 = vld [vmem:[%s592] sm:$0xf]
        %v597 = vsel %vm595, %v278, %v596
        %598 = vst [vmem:[%s592] sm:$0xf] %v597
        %599 = vst.msk [vmem:[%s592 + $0x4] sm:$0xf] %vm181, %v287
        %vm600 = vcmask 24576
        %vm601 = vmand %vm600, %vm269
        %v602 = vld [vmem:[%s592 + $0x8] sm:$0x1]
        %v603 = vsel %vm601, %v288, %v602
        %604 = vst [vmem:[%s592 + $0x8] sm:$0x1] %v603
        %v605 = vld [vmem:[%s592 + $0xc] sm:$0xf]
        %v606 = vsel %vm595, %v295, %v605
        %607 = vst [vmem:[%s592 + $0xc] sm:$0xf] %v606
        %608 = vst.msk [vmem:[%s592 + $0x10] sm:$0xf] %vm181, %v304
        %v609 = vld [vmem:[%s592 + $0x14] sm:$0x1]
        %v610 = vsel %vm601, %v305, %v609
        %611 = vst [vmem:[%s592 + $0x14] sm:$0x1] %v610
        %v612 = vld [vmem:[%s592 + $0x18] sm:$0xf]
        %v613 = vsel %vm595, %v312, %v612
        %614 = vst [vmem:[%s592 + $0x18] sm:$0xf] %v613
        %615 = vst.msk [vmem:[%s592 + $0x1c] sm:$0xf] %vm181, %v321
        %v616 = vld [vmem:[%s592 + $0x20] sm:$0x1]
        %v617 = vsel %vm601, %v322, %v616
        %618 = vst [vmem:[%s592 + $0x20] sm:$0x1] %v617
        %v619 = vld [vmem:[%s592 + $0x24] sm:$0xf]
        %v620 = vsel %vm595, %v329, %v619
        %621 = vst [vmem:[%s592 + $0x24] sm:$0xf] %v620
        %622 = vst.msk [vmem:[%s592 + $0x28] sm:$0xf] %vm181, %v338
        %v623 = vld [vmem:[%s592 + $0x2c] sm:$0x1]
        %v624 = vsel %vm601, %v339, %v623
        %625 = vst [vmem:[%s592 + $0x2c] sm:$0x1] %v624
        %v626 = vld [vmem:[%s592 + $0x30] sm:$0xf]
        %v627 = vsel %vm595, %v346, %v626
        %628 = vst [vmem:[%s592 + $0x30] sm:$0xf] %v627
        %629 = vst.msk [vmem:[%s592 + $0x34] sm:$0xf] %vm181, %v355
        %v630 = vld [vmem:[%s592 + $0x38] sm:$0x1]
        %v631 = vsel %vm601, %v356, %v630
        %632 = vst [vmem:[%s592 + $0x38] sm:$0x1] %v631
        %v633 = vld [vmem:[%s592 + $0x3c] sm:$0xf]
        %v634 = vsel %vm595, %v363, %v633
        %635 = vst [vmem:[%s592 + $0x3c] sm:$0xf] %v634
        %636 = vst.msk [vmem:[%s592 + $0x40] sm:$0xf] %vm181, %v372
        %v637 = vld [vmem:[%s592 + $0x44] sm:$0x1]
        %v638 = vsel %vm601, %v373, %v637
        %639 = vst [vmem:[%s592 + $0x44] sm:$0x1] %v638
        %v640 = vld [vmem:[%s592 + $0x48] sm:$0xf]
        %v641 = vsel %vm595, %v380, %v640
        %642 = vst [vmem:[%s592 + $0x48] sm:$0xf] %v641
        %643 = vst.msk [vmem:[%s592 + $0x4c] sm:$0xf] %vm181, %v389
        %v644 = vld [vmem:[%s592 + $0x50] sm:$0x1]
        %v645 = vsel %vm601, %v390, %v644
        %646 = vst [vmem:[%s592 + $0x50] sm:$0x1] %v645
        %v647 = vld [vmem:[%s592 + $0x54] sm:$0xf]
        %v648 = vsel %vm595, %v397, %v647
        %649 = vst [vmem:[%s592 + $0x54] sm:$0xf] %v648
        %650 = vst.msk [vmem:[%s592 + $0x58] sm:$0xf] %vm181, %v406
        %v651 = vld [vmem:[%s592 + $0x5c] sm:$0x1]
        %v652 = vsel %vm601, %v407, %v651
        %653 = vst [vmem:[%s592 + $0x5c] sm:$0x1] %v652
        %v654 = vld [vmem:[%s592 + $0x60] sm:$0xf]
        %v655 = vsel %vm595, %v414, %v654
        %656 = vst [vmem:[%s592 + $0x60] sm:$0xf] %v655
        %657 = vst.msk [vmem:[%s592 + $0x64] sm:$0xf] %vm181, %v423
        %v658 = vld [vmem:[%s592 + $0x68] sm:$0x1]
        %v659 = vsel %vm601, %v424, %v658
        %660 = vst [vmem:[%s592 + $0x68] sm:$0x1] %v659
        %v661 = vld [vmem:[%s592 + $0x6c] sm:$0xf]
        %v662 = vsel %vm595, %v431, %v661
        %663 = vst [vmem:[%s592 + $0x6c] sm:$0xf] %v662
        %664 = vst.msk [vmem:[%s592 + $0x70] sm:$0xf] %vm181, %v440
        %v665 = vld [vmem:[%s592 + $0x74] sm:$0x1]
        %v666 = vsel %vm601, %v441, %v665
        %667 = vst [vmem:[%s592 + $0x74] sm:$0x1] %v666
        %v668 = vld [vmem:[%s592 + $0x78] sm:$0xf]
        %v669 = vsel %vm595, %v448, %v668
        %670 = vst [vmem:[%s592 + $0x78] sm:$0xf] %v669
        %671 = vst.msk [vmem:[%s592 + $0x7c] sm:$0xf] %vm181, %v457
        %v672 = vld [vmem:[%s592 + $0x80] sm:$0x1]
        %v673 = vsel %vm601, %v458, %v672
        %674 = vst [vmem:[%s592 + $0x80] sm:$0x1] %v673
        %v675 = vld [vmem:[%s592 + $0x84] sm:$0xf]
        %v676 = vsel %vm595, %v465, %v675
        %677 = vst [vmem:[%s592 + $0x84] sm:$0xf] %v676
        %678 = vst.msk [vmem:[%s592 + $0x88] sm:$0xf] %vm181, %v474
        %v679 = vld [vmem:[%s592 + $0x8c] sm:$0x1]
        %v680 = vsel %vm601, %v475, %v679
        %681 = vst [vmem:[%s592 + $0x8c] sm:$0x1] %v680
        %v682 = vld [vmem:[%s592 + $0x90] sm:$0xf]
        %v683 = vsel %vm595, %v482, %v682
        %684 = vst [vmem:[%s592 + $0x90] sm:$0xf] %v683
        %685 = vst.msk [vmem:[%s592 + $0x94] sm:$0xf] %vm181, %v491
        %v686 = vld [vmem:[%s592 + $0x98] sm:$0x1]
        %v687 = vsel %vm601, %v492, %v686
        %688 = vst [vmem:[%s592 + $0x98] sm:$0x1] %v687
        %v689 = vld [vmem:[%s592 + $0x9c] sm:$0xf]
        %v690 = vsel %vm595, %v499, %v689
        %691 = vst [vmem:[%s592 + $0x9c] sm:$0xf] %v690
        %692 = vst.msk [vmem:[%s592 + $0xa0] sm:$0xf] %vm181, %v508
        %v693 = vld [vmem:[%s592 + $0xa4] sm:$0x1]
        %v694 = vsel %vm601, %v509, %v693
        %695 = vst [vmem:[%s592 + $0xa4] sm:$0x1] %v694
        %v696 = vld [vmem:[%s592 + $0xa8] sm:$0xf]
        %v697 = vsel %vm595, %v516, %v696
        %698 = vst [vmem:[%s592 + $0xa8] sm:$0xf] %v697
        %699 = vst.msk [vmem:[%s592 + $0xac] sm:$0xf] %vm181, %v525
        %v700 = vld [vmem:[%s592 + $0xb0] sm:$0x1]
        %v701 = vsel %vm601, %v526, %v700
        %702 = vst [vmem:[%s592 + $0xb0] sm:$0x1] %v701
        %v703 = vld [vmem:[%s592 + $0xb4] sm:$0xf]
        %v704 = vsel %vm595, %v533, %v703
        %705 = vst [vmem:[%s592 + $0xb4] sm:$0xf] %v704
        %706 = vst.msk [vmem:[%s592 + $0xb8] sm:$0xf] %vm181, %v542
        %v707 = vld [vmem:[%s592 + $0xbc] sm:$0x1]
        %v708 = vsel %vm601, %v543, %v707
        %709 = vst [vmem:[%s592 + $0xbc] sm:$0x1] %v708
        %v710 = vld [vmem:[#allocation2] sm:$0xf]
        %v711 = vld [vmem:[#allocation2 + $0x4] sm:$0xf]
        %v712 = vld [vmem:[#allocation2 + $0xc] sm:$0xf]
        %v713 = vld [vmem:[#allocation2 + $0x10] sm:$0xf]
        %v714 = vld [vmem:[#allocation2 + $0x18] sm:$0xf]
        %v715 = vld [vmem:[#allocation2 + $0x1c] sm:$0xf]
        %v716 = vld [vmem:[#allocation2 + $0x24] sm:$0xf]
        %v717 = vld [vmem:[#allocation2 + $0x28] sm:$0xf]
        %v718 = vld [vmem:[#allocation2 + $0x30] sm:$0xf]
        %v719 = vld [vmem:[#allocation2 + $0x34] sm:$0xf]
        %v720 = vld [vmem:[#allocation2 + $0x3c] sm:$0xf]
        %v721 = vld [vmem:[#allocation2 + $0x40] sm:$0xf]
        %v722 = vld [vmem:[#allocation2 + $0x48] sm:$0xf]
        %v723 = vld [vmem:[#allocation2 + $0x4c] sm:$0xf]
        %v724 = vld [vmem:[#allocation2 + $0x54] sm:$0xf]
        %v725 = vld [vmem:[#allocation2 + $0x58] sm:$0xf]
        %v726 = vld [vmem:[#allocation2 + $0x60] sm:$0xf]
        %v727 = vld [vmem:[#allocation2 + $0x64] sm:$0xf]
        %v728 = vld [vmem:[#allocation2 + $0x6c] sm:$0xf]
        %v729 = vld [vmem:[#allocation2 + $0x70] sm:$0xf]
        %v730 = vld [vmem:[#allocation2 + $0x78] sm:$0xf]
        %v731 = vld [vmem:[#allocation2 + $0x7c] sm:$0xf]
        %v732 = vld [vmem:[#allocation2 + $0x84] sm:$0xf]
        %v733 = vld [vmem:[#allocation2 + $0x88] sm:$0xf]
        %v734 = vld [vmem:[#allocation2 + $0x90] sm:$0xf]
        %v735 = vld [vmem:[#allocation2 + $0x94] sm:$0xf]
        %v736 = vld [vmem:[#allocation2 + $0x9c] sm:$0xf]
        %v737 = vld [vmem:[#allocation2 + $0xa0] sm:$0xf]
        %v738 = vld [vmem:[#allocation2 + $0xa8] sm:$0xf]
        %v739 = vld [vmem:[#allocation2 + $0xac] sm:$0xf]
        %v740 = vld [vmem:[#allocation2 + $0xb4] sm:$0xf]
        %v741 = vld [vmem:[#allocation2 + $0xb8] sm:$0xf]
        %v742 = vld [vmem:[#allocation2 + $0x8] sm:$0x1]
        %v743 = vld [vmem:[#allocation2 + $0x14] sm:$0x1]
        %v744 = vld [vmem:[#allocation2 + $0x20] sm:$0x1]
        %v745 = vld [vmem:[#allocation2 + $0x2c] sm:$0x1]
        %v746 = vld [vmem:[#allocation2 + $0x38] sm:$0x1]
        %v747 = vld [vmem:[#allocation2 + $0x44] sm:$0x1]
        %v748 = vld [vmem:[#allocation2 + $0x50] sm:$0x1]
        %v749 = vld [vmem:[#allocation2 + $0x5c] sm:$0x1]
        %v750 = vld [vmem:[#allocation2 + $0x68] sm:$0x1]
        %v751 = vld [vmem:[#allocation2 + $0x74] sm:$0x1]
        %v752 = vld [vmem:[#allocation2 + $0x80] sm:$0x1]
        %v753 = vld [vmem:[#allocation2 + $0x8c] sm:$0x1]
        %v754 = vld [vmem:[#allocation2 + $0x98] sm:$0x1]
        %v755 = vld [vmem:[#allocation2 + $0xa4] sm:$0x1]
        %v756 = vld [vmem:[#allocation2 + $0xb0] sm:$0x1]
        %v757 = vld [vmem:[#allocation2 + $0xbc] sm:$0x1]
        %v758 = vld [vmem:[#allocation2] sm:$0xe]
        %v759 = vld [vmem:[#allocation2 + $0xc] sm:$0xe]
        %v760 = vld [vmem:[#allocation2 + $0x18] sm:$0xe]
        %v761 = vld [vmem:[#allocation2 + $0x24] sm:$0xe]
        %v762 = vld [vmem:[#allocation2 + $0x30] sm:$0xe]
        %v763 = vld [vmem:[#allocation2 + $0x3c] sm:$0xe]
        %v764 = vld [vmem:[#allocation2 + $0x48] sm:$0xe]
        %v765 = vld [vmem:[#allocation2 + $0x54] sm:$0xe]
        %v766 = vld [vmem:[#allocation2 + $0x60] sm:$0xe]
        %v767 = vld [vmem:[#allocation2 + $0x6c] sm:$0xe]
        %v768 = vld [vmem:[#allocation2 + $0x78] sm:$0xe]
        %v769 = vld [vmem:[#allocation2 + $0x84] sm:$0xe]
        %v770 = vld [vmem:[#allocation2 + $0x90] sm:$0xe]
        %v771 = vld [vmem:[#allocation2 + $0x9c] sm:$0xe]
        %v772 = vld [vmem:[#allocation2 + $0xa8] sm:$0xe]
        %v773 = vld [vmem:[#allocation2 + $0xb4] sm:$0xe]
        %v774 = vld [vmem:[%s592] sm:$0xf]
        %v775 = vld [vmem:[%s592 + $0x4] sm:$0xf]
        %v776 = vld [vmem:[%s592 + $0xc] sm:$0xf]
        %v777 = vld [vmem:[%s592 + $0x10] sm:$0xf]
        %v778 = vld [vmem:[%s592 + $0x18] sm:$0xf]
        %v779 = vld [vmem:[%s592 + $0x1c] sm:$0xf]
        %v780 = vld [vmem:[%s592 + $0x24] sm:$0xf]
        %v781 = vld [vmem:[%s592 + $0x28] sm:$0xf]
        %v782 = vld [vmem:[%s592 + $0x30] sm:$0xf]
        %v783 = vld [vmem:[%s592 + $0x34] sm:$0xf]
        %v784 = vld [vmem:[%s592 + $0x3c] sm:$0xf]
        %v785 = vld [vmem:[%s592 + $0x40] sm:$0xf]
        %v786 = vld [vmem:[%s592 + $0x48] sm:$0xf]
        %v787 = vld [vmem:[%s592 + $0x4c] sm:$0xf]
        %v788 = vld [vmem:[%s592 + $0x54] sm:$0xf]
        %v789 = vld [vmem:[%s592 + $0x58] sm:$0xf]
        %v790 = vld [vmem:[%s592 + $0x60] sm:$0xf]
        %v791 = vld [vmem:[%s592 + $0x64] sm:$0xf]
        %v792 = vld [vmem:[%s592 + $0x6c] sm:$0xf]
        %v793 = vld [vmem:[%s592 + $0x70] sm:$0xf]
        %v794 = vld [vmem:[%s592 + $0x78] sm:$0xf]
        %v795 = vld [vmem:[%s592 + $0x7c] sm:$0xf]
        %v796 = vld [vmem:[%s592 + $0x84] sm:$0xf]
        %v797 = vld [vmem:[%s592 + $0x88] sm:$0xf]
        %v798 = vld [vmem:[%s592 + $0x90] sm:$0xf]
        %v799 = vld [vmem:[%s592 + $0x94] sm:$0xf]
        %v800 = vld [vmem:[%s592 + $0x9c] sm:$0xf]
        %v801 = vld [vmem:[%s592 + $0xa0] sm:$0xf]
        %v802 = vld [vmem:[%s592 + $0xa8] sm:$0xf]
        %v803 = vld [vmem:[%s592 + $0xac] sm:$0xf]
        %v804 = vld [vmem:[%s592 + $0xb4] sm:$0xf]
        %v805 = vld [vmem:[%s592 + $0xb8] sm:$0xf]
        %v806 = vld [vmem:[%s592 + $0x8] sm:$0x1]
        %v807 = vld [vmem:[%s592 + $0x14] sm:$0x1]
        %v808 = vld [vmem:[%s592 + $0x20] sm:$0x1]
        %v809 = vld [vmem:[%s592 + $0x2c] sm:$0x1]
        %v810 = vld [vmem:[%s592 + $0x38] sm:$0x1]
        %v811 = vld [vmem:[%s592 + $0x44] sm:$0x1]
        %v812 = vld [vmem:[%s592 + $0x50] sm:$0x1]
        %v813 = vld [vmem:[%s592 + $0x5c] sm:$0x1]
        %v814 = vld [vmem:[%s592 + $0x68] sm:$0x1]
        %v815 = vld [vmem:[%s592 + $0x74] sm:$0x1]
        %v816 = vld [vmem:[%s592 + $0x80] sm:$0x1]
        %v817 = vld [vmem:[%s592 + $0x8c] sm:$0x1]
        %v818 = vld [vmem:[%s592 + $0x98] sm:$0x1]
        %v819 = vld [vmem:[%s592 + $0xa4] sm:$0x1]
        %v820 = vld [vmem:[%s592 + $0xb0] sm:$0x1]
        %v821 = vld [vmem:[%s592 + $0xbc] sm:$0x1]
        %v822 = vld [vmem:[%s592] sm:$0xe]
        %v823 = vld [vmem:[%s592 + $0xc] sm:$0xe]
        %v824 = vld [vmem:[%s592 + $0x18] sm:$0xe]
        %v825 = vld [vmem:[%s592 + $0x24] sm:$0xe]
        %v826 = vld [vmem:[%s592 + $0x30] sm:$0xe]
        %v827 = vld [vmem:[%s592 + $0x3c] sm:$0xe]
        %v828 = vld [vmem:[%s592 + $0x48] sm:$0xe]
        %v829 = vld [vmem:[%s592 + $0x54] sm:$0xe]
        %v830 = vld [vmem:[%s592 + $0x60] sm:$0xe]
        %v831 = vld [vmem:[%s592 + $0x6c] sm:$0xe]
        %v832 = vld [vmem:[%s592 + $0x78] sm:$0xe]
        %v833 = vld [vmem:[%s592 + $0x84] sm:$0xe]
        %v834 = vld [vmem:[%s592 + $0x90] sm:$0xe]
        %v835 = vld [vmem:[%s592 + $0x9c] sm:$0xe]
        %v836 = vld [vmem:[%s592 + $0xa8] sm:$0xe]
        %v837 = vld [vmem:[%s592 + $0xb4] sm:$0xe]
        %s838 = scalar_lea.vmem [#allocation2], 24
        %v839 = vld [vmem:[%s838] sm:$0xf]
        %v840 = vld [vmem:[%s838 + $0x4] sm:$0xf]
        %v841 = vld [vmem:[%s838 + $0xc] sm:$0xf]
        %v842 = vld [vmem:[%s838 + $0x10] sm:$0xf]
        %v843 = vld [vmem:[%s838 + $0x18] sm:$0xf]
        %v844 = vld [vmem:[%s838 + $0x1c] sm:$0xf]
        %v845 = vld [vmem:[%s838 + $0x24] sm:$0xf]
        %v846 = vld [vmem:[%s838 + $0x28] sm:$0xf]
        %v847 = vld [vmem:[%s838 + $0x30] sm:$0xf]
        %v848 = vld [vmem:[%s838 + $0x34] sm:$0xf]
        %v849 = vld [vmem:[%s838 + $0x3c] sm:$0xf]
        %v850 = vld [vmem:[%s838 + $0x40] sm:$0xf]
        %v851 = vld [vmem:[%s838 + $0x48] sm:$0xf]
        %v852 = vld [vmem:[%s838 + $0x4c] sm:$0xf]
        %v853 = vld [vmem:[%s838 + $0x54] sm:$0xf]
        %v854 = vld [vmem:[%s838 + $0x58] sm:$0xf]
        %v855 = vld [vmem:[%s838 + $0x60] sm:$0xf]
        %v856 = vld [vmem:[%s838 + $0x64] sm:$0xf]
        %v857 = vld [vmem:[%s838 + $0x6c] sm:$0xf]
        %v858 = vld [vmem:[%s838 + $0x70] sm:$0xf]
        %v859 = vld [vmem:[%s838 + $0x78] sm:$0xf]
        %v860 = vld [vmem:[%s838 + $0x7c] sm:$0xf]
        %v861 = vld [vmem:[%s838 + $0x84] sm:$0xf]
        %v862 = vld [vmem:[%s838 + $0x88] sm:$0xf]
        %v863 = vld [vmem:[%s838 + $0x90] sm:$0xf]
        %v864 = vld [vmem:[%s838 + $0x94] sm:$0xf]
        %v865 = vld [vmem:[%s838 + $0x9c] sm:$0xf]
        %v866 = vld [vmem:[%s838 + $0xa0] sm:$0xf]
        %v867 = vld [vmem:[%s838 + $0xa8] sm:$0xf]
        %v868 = vld [vmem:[%s838 + $0xac] sm:$0xf]
        %v869 = vld [vmem:[%s838 + $0xb4] sm:$0xf]
        %v870 = vld [vmem:[%s838 + $0xb8] sm:$0xf]
        %v871 = vld [vmem:[%s838 + $0x8] sm:$0x1]
        %v872 = vld [vmem:[%s838 + $0x14] sm:$0x1]
        %v873 = vld [vmem:[%s838 + $0x20] sm:$0x1]
        %v874 = vld [vmem:[%s838 + $0x2c] sm:$0x1]
        %v875 = vld [vmem:[%s838 + $0x38] sm:$0x1]
        %v876 = vld [vmem:[%s838 + $0x44] sm:$0x1]
        %v877 = vld [vmem:[%s838 + $0x50] sm:$0x1]
        %v878 = vld [vmem:[%s838 + $0x5c] sm:$0x1]
        %v879 = vld [vmem:[%s838 + $0x68] sm:$0x1]
        %v880 = vld [vmem:[%s838 + $0x74] sm:$0x1]
        %v881 = vld [vmem:[%s838 + $0x80] sm:$0x1]
        %v882 = vld [vmem:[%s838 + $0x8c] sm:$0x1]
        %v883 = vld [vmem:[%s838 + $0x98] sm:$0x1]
        %v884 = vld [vmem:[%s838 + $0xa4] sm:$0x1]
        %v885 = vld [vmem:[%s838 + $0xb0] sm:$0x1]
        %v886 = vld [vmem:[%s838 + $0xbc] sm:$0x1]
        %v887 = vld [vmem:[%s838] sm:$0xe]
        %v888 = vld [vmem:[%s838 + $0xc] sm:$0xe]
        %v889 = vld [vmem:[%s838 + $0x18] sm:$0xe]
        %v890 = vld [vmem:[%s838 + $0x24] sm:$0xe]
        %v891 = vld [vmem:[%s838 + $0x30] sm:$0xe]
        %v892 = vld [vmem:[%s838 + $0x3c] sm:$0xe]
        %v893 = vld [vmem:[%s838 + $0x48] sm:$0xe]
        %v894 = vld [vmem:[%s838 + $0x54] sm:$0xe]
        %v895 = vld [vmem:[%s838 + $0x60] sm:$0xe]
        %v896 = vld [vmem:[%s838 + $0x6c] sm:$0xe]
        %v897 = vld [vmem:[%s838 + $0x78] sm:$0xe]
        %v898 = vld [vmem:[%s838 + $0x84] sm:$0xe]
        %v899 = vld [vmem:[%s838 + $0x90] sm:$0xe]
        %v900 = vld [vmem:[%s838 + $0x9c] sm:$0xe]
        %v901 = vld [vmem:[%s838 + $0xa8] sm:$0xe]
        %v902 = vld [vmem:[%s838 + $0xb4] sm:$0xe]
        %v935 = vunpack.c.l.b16 %v710
        %v936 = vunpack.c.l.b16 %v711
        %v937 = vunpack.c.l.b16 %v712
        %v938 = vunpack.c.l.b16 %v713
        %v939 = vunpack.c.l.b16 %v714
        %v940 = vunpack.c.l.b16 %v715
        %v941 = vunpack.c.l.b16 %v716
        %v942 = vunpack.c.l.b16 %v717
        %v943 = vunpack.c.l.b16 %v718
        %v944 = vunpack.c.l.b16 %v719
        %v945 = vunpack.c.l.b16 %v720
        %v946 = vunpack.c.l.b16 %v721
        %v947 = vunpack.c.l.b16 %v722
        %v948 = vunpack.c.l.b16 %v723
        %v949 = vunpack.c.l.b16 %v724
        %v950 = vunpack.c.l.b16 %v725
        %v951 = vunpack.c.l.b16 %v726
        %v952 = vunpack.c.l.b16 %v727
        %v953 = vunpack.c.l.b16 %v728
        %v954 = vunpack.c.l.b16 %v729
        %v955 = vunpack.c.l.b16 %v730
        %v956 = vunpack.c.l.b16 %v731
        %v957 = vunpack.c.l.b16 %v732
        %v958 = vunpack.c.l.b16 %v733
        %v959 = vunpack.c.l.b16 %v734
        %v960 = vunpack.c.l.b16 %v735
        %v961 = vunpack.c.l.b16 %v736
        %v962 = vunpack.c.l.b16 %v737
        %v963 = vunpack.c.l.b16 %v738
        %v964 = vunpack.c.l.b16 %v739
        %v965 = vunpack.c.l.b16 %v740
        %v966 = vunpack.c.l.b16 %v741
        %v967 = vpack.c.b16 %v936, %v935
        %v968 = vpack.c.b16 %v938, %v937
        %v969 = vpack.c.b16 %v940, %v939
        %v970 = vpack.c.b16 %v942, %v941
        %v971 = vpack.c.b16 %v944, %v943
        %v972 = vpack.c.b16 %v946, %v945
        %v973 = vpack.c.b16 %v948, %v947
        %v974 = vpack.c.b16 %v950, %v949
        %v975 = vpack.c.b16 %v952, %v951
        %v976 = vpack.c.b16 %v954, %v953
        %v977 = vpack.c.b16 %v956, %v955
        %v978 = vpack.c.b16 %v958, %v957
        %v979 = vpack.c.b16 %v960, %v959
        %v980 = vpack.c.b16 %v962, %v961
        %v981 = vpack.c.b16 %v964, %v963
        %v982 = vpack.c.b16 %v966, %v965
        %v999 = vunpack.c.l.b16 %v742
        %v1000 = vunpack.c.l.b16 %v743
        %v1001 = vunpack.c.l.b16 %v744
        %v1002 = vunpack.c.l.b16 %v745
        %v1003 = vunpack.c.l.b16 %v746
        %v1004 = vunpack.c.l.b16 %v747
        %v1005 = vunpack.c.l.b16 %v748
        %v1006 = vunpack.c.l.b16 %v749
        %v1007 = vunpack.c.l.b16 %v750
        %v1008 = vunpack.c.l.b16 %v751
        %v1009 = vunpack.c.l.b16 %v752
        %v1010 = vunpack.c.l.b16 %v753
        %v1011 = vunpack.c.l.b16 %v754
        %v1012 = vunpack.c.l.b16 %v755
        %v1013 = vunpack.c.l.b16 %v756
        %v1014 = vunpack.c.l.b16 %v757
        %v1015 = vpack.c.b16 %v999, %v999
        %v1016 = vpack.c.b16 %v1000, %v1000
        %v1017 = vpack.c.b16 %v1001, %v1001
        %v1018 = vpack.c.b16 %v1002, %v1002
        %v1019 = vpack.c.b16 %v1003, %v1003
        %v1020 = vpack.c.b16 %v1004, %v1004
        %v1021 = vpack.c.b16 %v1005, %v1005
        %v1022 = vpack.c.b16 %v1006, %v1006
        %v1023 = vpack.c.b16 %v1007, %v1007
        %v1024 = vpack.c.b16 %v1008, %v1008
        %v1025 = vpack.c.b16 %v1009, %v1009
        %v1026 = vpack.c.b16 %v1010, %v1010
        %v1027 = vpack.c.b16 %v1011, %v1011
        %v1028 = vpack.c.b16 %v1012, %v1012
        %v1029 = vpack.c.b16 %v1013, %v1013
        %v1030 = vpack.c.b16 %v1014, %v1014
        %vm1031 = vsmask.f32 7424
        %v1033 = vshrl.u32 %v967, 16
        %v1035 = vshll.u32 %v967, 16
        %v1037 = vrot.slane %v1035, 1
        %v1038 = vor.u32 %v1033, %v1037
        %v1040 = vshll.u32 %v1015, 16
        %v1042 = vrot.slane %v1040, 1
        %v1043 = vsel %vm1031, %v1038, %v1042
        %v1045 = vshrl.u32 %v968, 16
        %v1047 = vshll.u32 %v968, 16
        %v1049 = vrot.slane %v1047, 1
        %v1050 = vor.u32 %v1045, %v1049
        %v1052 = vshll.u32 %v1016, 16
        %v1054 = vrot.slane %v1052, 1
        %v1055 = vsel %vm1031, %v1050, %v1054
        %v1057 = vshrl.u32 %v969, 16
        %v1059 = vshll.u32 %v969, 16
        %v1061 = vrot.slane %v1059, 1
        %v1062 = vor.u32 %v1057, %v1061
        %v1064 = vshll.u32 %v1017, 16
        %v1066 = vrot.slane %v1064, 1
        %v1067 = vsel %vm1031, %v1062, %v1066
        %v1069 = vshrl.u32 %v970, 16
        %v1071 = vshll.u32 %v970, 16
        %v1073 = vrot.slane %v1071, 1
        %v1074 = vor.u32 %v1069, %v1073
        %v1076 = vshll.u32 %v1018, 16
        %v1078 = vrot.slane %v1076, 1
        %v1079 = vsel %vm1031, %v1074, %v1078
        %v1081 = vshrl.u32 %v971, 16
        %v1083 = vshll.u32 %v971, 16
        %v1085 = vrot.slane %v1083, 1
        %v1086 = vor.u32 %v1081, %v1085
        %v1088 = vshll.u32 %v1019, 16
        %v1090 = vrot.slane %v1088, 1
        %v1091 = vsel %vm1031, %v1086, %v1090
        %v1093 = vshrl.u32 %v972, 16
        %v1095 = vshll.u32 %v972, 16
        %v1097 = vrot.slane %v1095, 1
        %v1098 = vor.u32 %v1093, %v1097
        %v1100 = vshll.u32 %v1020, 16
        %v1102 = vrot.slane %v1100, 1
        %v1103 = vsel %vm1031, %v1098, %v1102
        %v1105 = vshrl.u32 %v973, 16
        %v1107 = vshll.u32 %v973, 16
        %v1109 = vrot.slane %v1107, 1
        %v1110 = vor.u32 %v1105, %v1109
        %v1112 = vshll.u32 %v1021, 16
        %v1114 = vrot.slane %v1112, 1
        %v1115 = vsel %vm1031, %v1110, %v1114
        %v1117 = vshrl.u32 %v974, 16
        %v1119 = vshll.u32 %v974, 16
        %v1121 = vrot.slane %v1119, 1
        %v1122 = vor.u32 %v1117, %v1121
        %v1124 = vshll.u32 %v1022, 16
        %v1126 = vrot.slane %v1124, 1
        %v1127 = vsel %vm1031, %v1122, %v1126
        %v1129 = vshrl.u32 %v975, 16
        %v1131 = vshll.u32 %v975, 16
        %v1133 = vrot.slane %v1131, 1
        %v1134 = vor.u32 %v1129, %v1133
        %v1136 = vshll.u32 %v1023, 16
        %v1138 = vrot.slane %v1136, 1
        %v1139 = vsel %vm1031, %v1134, %v1138
        %v1141 = vshrl.u32 %v976, 16
        %v1143 = vshll.u32 %v976, 16
        %v1145 = vrot.slane %v1143, 1
        %v1146 = vor.u32 %v1141, %v1145
        %v1148 = vshll.u32 %v1024, 16
        %v1150 = vrot.slane %v1148, 1
        %v1151 = vsel %vm1031, %v1146, %v1150
        %v1153 = vshrl.u32 %v977, 16
        %v1155 = vshll.u32 %v977, 16
        %v1157 = vrot.slane %v1155, 1
        %v1158 = vor.u32 %v1153, %v1157
        %v1160 = vshll.u32 %v1025, 16
        %v1162 = vrot.slane %v1160, 1
        %v1163 = vsel %vm1031, %v1158, %v1162
        %v1165 = vshrl.u32 %v978, 16
        %v1167 = vshll.u32 %v978, 16
        %v1169 = vrot.slane %v1167, 1
        %v1170 = vor.u32 %v1165, %v1169
        %v1172 = vshll.u32 %v1026, 16
        %v1174 = vrot.slane %v1172, 1
        %v1175 = vsel %vm1031, %v1170, %v1174
        %v1177 = vshrl.u32 %v979, 16
        %v1179 = vshll.u32 %v979, 16
        %v1181 = vrot.slane %v1179, 1
        %v1182 = vor.u32 %v1177, %v1181
        %v1184 = vshll.u32 %v1027, 16
        %v1186 = vrot.slane %v1184, 1
        %v1187 = vsel %vm1031, %v1182, %v1186
        %v1189 = vshrl.u32 %v980, 16
        %v1191 = vshll.u32 %v980, 16
        %v1193 = vrot.slane %v1191, 1
        %v1194 = vor.u32 %v1189, %v1193
        %v1196 = vshll.u32 %v1028, 16
        %v1198 = vrot.slane %v1196, 1
        %v1199 = vsel %vm1031, %v1194, %v1198
        %v1201 = vshrl.u32 %v981, 16
        %v1203 = vshll.u32 %v981, 16
        %v1205 = vrot.slane %v1203, 1
        %v1206 = vor.u32 %v1201, %v1205
        %v1208 = vshll.u32 %v1029, 16
        %v1210 = vrot.slane %v1208, 1
        %v1211 = vsel %vm1031, %v1206, %v1210
        %v1213 = vshrl.u32 %v982, 16
        %v1215 = vshll.u32 %v982, 16
        %v1217 = vrot.slane %v1215, 1
        %v1218 = vor.u32 %v1213, %v1217
        %v1220 = vshll.u32 %v1030, 16
        %v1222 = vrot.slane %v1220, 1
        %v1223 = vsel %vm1031, %v1218, %v1222
        %1224 = vrot.lane.b32.xlu0 %v1043, 4
        %v1225 = vpop.permute.xlu0 %1224
        %1226 = vrot.lane.b32.xlu0 %v1055, 4
        %v1227 = vpop.permute.xlu0 %1226
        %1228 = vrot.lane.b32.xlu0 %v1067, 4
        %v1229 = vpop.permute.xlu0 %1228
        %1230 = vrot.lane.b32.xlu0 %v1079, 4
        %v1231 = vpop.permute.xlu0 %1230
        %1232 = vrot.lane.b32.xlu0 %v1091, 4
        %v1233 = vpop.permute.xlu0 %1232
        %1234 = vrot.lane.b32.xlu0 %v1103, 4
        %v1235 = vpop.permute.xlu0 %1234
        %1236 = vrot.lane.b32.xlu0 %v1115, 4
        %v1237 = vpop.permute.xlu0 %1236
        %1238 = vrot.lane.b32.xlu0 %v1127, 4
        %v1239 = vpop.permute.xlu0 %1238
        %1240 = vrot.lane.b32.xlu0 %v1139, 4
        %v1241 = vpop.permute.xlu0 %1240
        %1242 = vrot.lane.b32.xlu0 %v1151, 4
        %v1243 = vpop.permute.xlu0 %1242
        %1244 = vrot.lane.b32.xlu0 %v1163, 4
        %v1245 = vpop.permute.xlu0 %1244
        %1246 = vrot.lane.b32.xlu0 %v1175, 4
        %v1247 = vpop.permute.xlu0 %1246
        %1248 = vrot.lane.b32.xlu0 %v1187, 4
        %v1249 = vpop.permute.xlu0 %1248
        %1250 = vrot.lane.b32.xlu0 %v1199, 4
        %v1251 = vpop.permute.xlu0 %1250
        %1252 = vrot.lane.b32.xlu0 %v1211, 4
        %v1253 = vpop.permute.xlu0 %1252
        %1254 = vrot.lane.b32.xlu0 %v1223, 4
        %v1255 = vpop.permute.xlu0 %1254
        %v1272 = vunpack.c.l.b16 %v758
        %v1273 = vunpack.c.l.b16 %v759
        %v1274 = vunpack.c.l.b16 %v760
        %v1275 = vunpack.c.l.b16 %v761
        %v1276 = vunpack.c.l.b16 %v762
        %v1277 = vunpack.c.l.b16 %v763
        %v1278 = vunpack.c.l.b16 %v764
        %v1279 = vunpack.c.l.b16 %v765
        %v1280 = vunpack.c.l.b16 %v766
        %v1281 = vunpack.c.l.b16 %v767
        %v1282 = vunpack.c.l.b16 %v768
        %v1283 = vunpack.c.l.b16 %v769
        %v1284 = vunpack.c.l.b16 %v770
        %v1285 = vunpack.c.l.b16 %v771
        %v1286 = vunpack.c.l.b16 %v772
        %v1287 = vunpack.c.l.b16 %v773
        %v1288 = vpack.c.b16 %v936, %v1272
        %v1289 = vpack.c.b16 %v938, %v1273
        %v1290 = vpack.c.b16 %v940, %v1274
        %v1291 = vpack.c.b16 %v942, %v1275
        %v1292 = vpack.c.b16 %v944, %v1276
        %v1293 = vpack.c.b16 %v946, %v1277
        %v1294 = vpack.c.b16 %v948, %v1278
        %v1295 = vpack.c.b16 %v950, %v1279
        %v1296 = vpack.c.b16 %v952, %v1280
        %v1297 = vpack.c.b16 %v954, %v1281
        %v1298 = vpack.c.b16 %v956, %v1282
        %v1299 = vpack.c.b16 %v958, %v1283
        %v1300 = vpack.c.b16 %v960, %v1284
        %v1301 = vpack.c.b16 %v962, %v1285
        %v1302 = vpack.c.b16 %v964, %v1286
        %v1303 = vpack.c.b16 %v966, %v1287
        %vm1304 = vcmask 1046528
        %v1305 = vrot.slane %v1288, 1
        %v1306 = vrot.slane %v1015, 1
        %v1307 = vsel %vm1304, %v1305, %v1306
        %v1308 = vrot.slane %v1289, 1
        %v1309 = vrot.slane %v1016, 1
        %v1310 = vsel %vm1304, %v1308, %v1309
        %v1311 = vrot.slane %v1290, 1
        %v1312 = vrot.slane %v1017, 1
        %v1313 = vsel %vm1304, %v1311, %v1312
        %v1314 = vrot.slane %v1291, 1
        %v1315 = vrot.slane %v1018, 1
        %v1316 = vsel %vm1304, %v1314, %v1315
        %v1317 = vrot.slane %v1292, 1
        %v1318 = vrot.slane %v1019, 1
        %v1319 = vsel %vm1304, %v1317, %v1318
        %v1320 = vrot.slane %v1293, 1
        %v1321 = vrot.slane %v1020, 1
        %v1322 = vsel %vm1304, %v1320, %v1321
        %v1323 = vrot.slane %v1294, 1
        %v1324 = vrot.slane %v1021, 1
        %v1325 = vsel %vm1304, %v1323, %v1324
        %v1326 = vrot.slane %v1295, 1
        %v1327 = vrot.slane %v1022, 1
        %v1328 = vsel %vm1304, %v1326, %v1327
        %v1329 = vrot.slane %v1296, 1
        %v1330 = vrot.slane %v1023, 1
        %v1331 = vsel %vm1304, %v1329, %v1330
        %v1332 = vrot.slane %v1297, 1
        %v1333 = vrot.slane %v1024, 1
        %v1334 = vsel %vm1304, %v1332, %v1333
        %v1335 = vrot.slane %v1298, 1
        %v1336 = vrot.slane %v1025, 1
        %v1337 = vsel %vm1304, %v1335, %v1336
        %v1338 = vrot.slane %v1299, 1
        %v1339 = vrot.slane %v1026, 1
        %v1340 = vsel %vm1304, %v1338, %v1339
        %v1341 = vrot.slane %v1300, 1
        %v1342 = vrot.slane %v1027, 1
        %v1343 = vsel %vm1304, %v1341, %v1342
        %v1344 = vrot.slane %v1301, 1
        %v1345 = vrot.slane %v1028, 1
        %v1346 = vsel %vm1304, %v1344, %v1345
        %v1347 = vrot.slane %v1302, 1
        %v1348 = vrot.slane %v1029, 1
        %v1349 = vsel %vm1304, %v1347, %v1348
        %v1350 = vrot.slane %v1303, 1
        %v1351 = vrot.slane %v1030, 1
        %v1352 = vsel %vm1304, %v1350, %v1351
        %1353 = vrot.lane.b32.xlu0 %v1307, 8
        %v1354 = vpop.permute.xlu0 %1353
        %1355 = vrot.lane.b32.xlu0 %v1310, 8
        %v1356 = vpop.permute.xlu0 %1355
        %1357 = vrot.lane.b32.xlu0 %v1313, 8
        %v1358 = vpop.permute.xlu0 %1357
        %1359 = vrot.lane.b32.xlu0 %v1316, 8
        %v1360 = vpop.permute.xlu0 %1359
        %1361 = vrot.lane.b32.xlu0 %v1319, 8
        %v1362 = vpop.permute.xlu0 %1361
        %1363 = vrot.lane.b32.xlu0 %v1322, 8
        %v1364 = vpop.permute.xlu0 %1363
        %1365 = vrot.lane.b32.xlu0 %v1325, 8
        %v1366 = vpop.permute.xlu0 %1365
        %1367 = vrot.lane.b32.xlu0 %v1328, 8
        %v1368 = vpop.permute.xlu0 %1367
        %1369 = vrot.lane.b32.xlu0 %v1331, 8
        %v1370 = vpop.permute.xlu0 %1369
        %1371 = vrot.lane.b32.xlu0 %v1334, 8
        %v1372 = vpop.permute.xlu0 %1371
        %1373 = vrot.lane.b32.xlu0 %v1337, 8
        %v1374 = vpop.permute.xlu0 %1373
        %1375 = vrot.lane.b32.xlu0 %v1340, 8
        %v1376 = vpop.permute.xlu0 %1375
        %1377 = vrot.lane.b32.xlu0 %v1343, 8
        %v1378 = vpop.permute.xlu0 %1377
        %1379 = vrot.lane.b32.xlu0 %v1346, 8
        %v1380 = vpop.permute.xlu0 %1379
        %1381 = vrot.lane.b32.xlu0 %v1349, 8
        %v1382 = vpop.permute.xlu0 %1381
        %1383 = vrot.lane.b32.xlu0 %v1352, 8
        %v1384 = vpop.permute.xlu0 %1383
        %v1417 = vunpack.c.l.b16 %v774
        %v1418 = vunpack.c.l.b16 %v775
        %v1419 = vunpack.c.l.b16 %v776
        %v1420 = vunpack.c.l.b16 %v777
        %v1421 = vunpack.c.l.b16 %v778
        %v1422 = vunpack.c.l.b16 %v779
        %v1423 = vunpack.c.l.b16 %v780
        %v1424 = vunpack.c.l.b16 %v781
        %v1425 = vunpack.c.l.b16 %v782
        %v1426 = vunpack.c.l.b16 %v783
        %v1427 = vunpack.c.l.b16 %v784
        %v1428 = vunpack.c.l.b16 %v785
        %v1429 = vunpack.c.l.b16 %v786
        %v1430 = vunpack.c.l.b16 %v787
        %v1431 = vunpack.c.l.b16 %v788
        %v1432 = vunpack.c.l.b16 %v789
        %v1433 = vunpack.c.l.b16 %v790
        %v1434 = vunpack.c.l.b16 %v791
        %v1435 = vunpack.c.l.b16 %v792
        %v1436 = vunpack.c.l.b16 %v793
        %v1437 = vunpack.c.l.b16 %v794
        %v1438 = vunpack.c.l.b16 %v795
        %v1439 = vunpack.c.l.b16 %v796
        %v1440 = vunpack.c.l.b16 %v797
        %v1441 = vunpack.c.l.b16 %v798
        %v1442 = vunpack.c.l.b16 %v799
        %v1443 = vunpack.c.l.b16 %v800
        %v1444 = vunpack.c.l.b16 %v801
        %v1445 = vunpack.c.l.b16 %v802
        %v1446 = vunpack.c.l.b16 %v803
        %v1447 = vunpack.c.l.b16 %v804
        %v1448 = vunpack.c.l.b16 %v805
        %v1449 = vpack.c.b16 %v1418, %v1417
        %v1450 = vpack.c.b16 %v1420, %v1419
        %v1451 = vpack.c.b16 %v1422, %v1421
        %v1452 = vpack.c.b16 %v1424, %v1423
        %v1453 = vpack.c.b16 %v1426, %v1425
        %v1454 = vpack.c.b16 %v1428, %v1427
        %v1455 = vpack.c.b16 %v1430, %v1429
        %v1456 = vpack.c.b16 %v1432, %v1431
        %v1457 = vpack.c.b16 %v1434, %v1433
        %v1458 = vpack.c.b16 %v1436, %v1435
        %v1459 = vpack.c.b16 %v1438, %v1437
        %v1460 = vpack.c.b16 %v1440, %v1439
        %v1461 = vpack.c.b16 %v1442, %v1441
        %v1462 = vpack.c.b16 %v1444, %v1443
        %v1463 = vpack.c.b16 %v1446, %v1445
        %v1464 = vpack.c.b16 %v1448, %v1447
        %1465 = vrot.lane.b32.xlu0 %v1449, 12
        %v1466 = vpop.permute.xlu0 %1465
        %1467 = vrot.lane.b32.xlu0 %v1450, 12
        %v1468 = vpop.permute.xlu0 %1467
        %1469 = vrot.lane.b32.xlu0 %v1451, 12
        %v1470 = vpop.permute.xlu0 %1469
        %1471 = vrot.lane.b32.xlu0 %v1452, 12
        %v1472 = vpop.permute.xlu0 %1471
        %1473 = vrot.lane.b32.xlu0 %v1453, 12
        %v1474 = vpop.permute.xlu0 %1473
        %1475 = vrot.lane.b32.xlu0 %v1454, 12
        %v1476 = vpop.permute.xlu0 %1475
        %1477 = vrot.lane.b32.xlu0 %v1455, 12
        %v1478 = vpop.permute.xlu0 %1477
        %1479 = vrot.lane.b32.xlu0 %v1456, 12
        %v1480 = vpop.permute.xlu0 %1479
        %1481 = vrot.lane.b32.xlu0 %v1457, 12
        %v1482 = vpop.permute.xlu0 %1481
        %1483 = vrot.lane.b32.xlu0 %v1458, 12
        %v1484 = vpop.permute.xlu0 %1483
        %1485 = vrot.lane.b32.xlu0 %v1459, 12
        %v1486 = vpop.permute.xlu0 %1485
        %1487 = vrot.lane.b32.xlu0 %v1460, 12
        %v1488 = vpop.permute.xlu0 %1487
        %1489 = vrot.lane.b32.xlu0 %v1461, 12
        %v1490 = vpop.permute.xlu0 %1489
        %1491 = vrot.lane.b32.xlu0 %v1462, 12
        %v1492 = vpop.permute.xlu0 %1491
        %1493 = vrot.lane.b32.xlu0 %v1463, 12
        %v1494 = vpop.permute.xlu0 %1493
        %1495 = vrot.lane.b32.xlu0 %v1464, 12
        %v1496 = vpop.permute.xlu0 %1495
        %v1513 = vunpack.c.l.b16 %v806
        %v1514 = vunpack.c.l.b16 %v807
        %v1515 = vunpack.c.l.b16 %v808
        %v1516 = vunpack.c.l.b16 %v809
        %v1517 = vunpack.c.l.b16 %v810
        %v1518 = vunpack.c.l.b16 %v811
        %v1519 = vunpack.c.l.b16 %v812
        %v1520 = vunpack.c.l.b16 %v813
        %v1521 = vunpack.c.l.b16 %v814
        %v1522 = vunpack.c.l.b16 %v815
        %v1523 = vunpack.c.l.b16 %v816
        %v1524 = vunpack.c.l.b16 %v817
        %v1525 = vunpack.c.l.b16 %v818
        %v1526 = vunpack.c.l.b16 %v819
        %v1527 = vunpack.c.l.b16 %v820
        %v1528 = vunpack.c.l.b16 %v821
        %v1529 = vpack.c.b16 %v1513, %v1513
        %v1530 = vpack.c.b16 %v1514, %v1514
        %v1531 = vpack.c.b16 %v1515, %v1515
        %v1532 = vpack.c.b16 %v1516, %v1516
        %v1533 = vpack.c.b16 %v1517, %v1517
        %v1534 = vpack.c.b16 %v1518, %v1518
        %v1535 = vpack.c.b16 %v1519, %v1519
        %v1536 = vpack.c.b16 %v1520, %v1520
        %v1537 = vpack.c.b16 %v1521, %v1521
        %v1538 = vpack.c.b16 %v1522, %v1522
        %v1539 = vpack.c.b16 %v1523, %v1523
        %v1540 = vpack.c.b16 %v1524, %v1524
        %v1541 = vpack.c.b16 %v1525, %v1525
        %v1542 = vpack.c.b16 %v1526, %v1526
        %v1543 = vpack.c.b16 %v1527, %v1527
        %v1544 = vpack.c.b16 %v1528, %v1528
        %v1546 = vshrl.u32 %v1449, 16
        %v1548 = vshll.u32 %v1449, 16
        %v1550 = vrot.slane %v1548, 1
        %v1551 = vor.u32 %v1546, %v1550
        %v1553 = vshll.u32 %v1529, 16
        %v1555 = vrot.slane %v1553, 1
        %v1556 = vsel %vm1031, %v1551, %v1555
        %v1558 = vshrl.u32 %v1450, 16
        %v1560 = vshll.u32 %v1450, 16
        %v1562 = vrot.slane %v1560, 1
        %v1563 = vor.u32 %v1558, %v1562
        %v1565 = vshll.u32 %v1530, 16
        %v1567 = vrot.slane %v1565, 1
        %v1568 = vsel %vm1031, %v1563, %v1567
        %v1570 = vshrl.u32 %v1451, 16
        %v1572 = vshll.u32 %v1451, 16
        %v1574 = vrot.slane %v1572, 1
        %v1575 = vor.u32 %v1570, %v1574
        %v1577 = vshll.u32 %v1531, 16
        %v1579 = vrot.slane %v1577, 1
        %v1580 = vsel %vm1031, %v1575, %v1579
        %v1582 = vshrl.u32 %v1452, 16
        %v1584 = vshll.u32 %v1452, 16
        %v1586 = vrot.slane %v1584, 1
        %v1587 = vor.u32 %v1582, %v1586
        %v1589 = vshll.u32 %v1532, 16
        %v1591 = vrot.slane %v1589, 1
        %v1592 = vsel %vm1031, %v1587, %v1591
        %v1594 = vshrl.u32 %v1453, 16
        %v1596 = vshll.u32 %v1453, 16
        %v1598 = vrot.slane %v1596, 1
        %v1599 = vor.u32 %v1594, %v1598
        %v1601 = vshll.u32 %v1533, 16
        %v1603 = vrot.slane %v1601, 1
        %v1604 = vsel %vm1031, %v1599, %v1603
        %v1606 = vshrl.u32 %v1454, 16
        %v1608 = vshll.u32 %v1454, 16
        %v1610 = vrot.slane %v1608, 1
        %v1611 = vor.u32 %v1606, %v1610
        %v1613 = vshll.u32 %v1534, 16
        %v1615 = vrot.slane %v1613, 1
        %v1616 = vsel %vm1031, %v1611, %v1615
        %v1618 = vshrl.u32 %v1455, 16
        %v1620 = vshll.u32 %v1455, 16
        %v1622 = vrot.slane %v1620, 1
        %v1623 = vor.u32 %v1618, %v1622
        %v1625 = vshll.u32 %v1535, 16
        %v1627 = vrot.slane %v1625, 1
        %v1628 = vsel %vm1031, %v1623, %v1627
        %v1630 = vshrl.u32 %v1456, 16
        %v1632 = vshll.u32 %v1456, 16
        %v1634 = vrot.slane %v1632, 1
        %v1635 = vor.u32 %v1630, %v1634
        %v1637 = vshll.u32 %v1536, 16
        %v1639 = vrot.slane %v1637, 1
        %v1640 = vsel %vm1031, %v1635, %v1639
        %v1642 = vshrl.u32 %v1457, 16
        %v1644 = vshll.u32 %v1457, 16
        %v1646 = vrot.slane %v1644, 1
        %v1647 = vor.u32 %v1642, %v1646
        %v1649 = vshll.u32 %v1537, 16
        %v1651 = vrot.slane %v1649, 1
        %v1652 = vsel %vm1031, %v1647, %v1651
        %v1654 = vshrl.u32 %v1458, 16
        %v1656 = vshll.u32 %v1458, 16
        %v1658 = vrot.slane %v1656, 1
        %v1659 = vor.u32 %v1654, %v1658
        %v1661 = vshll.u32 %v1538, 16
        %v1663 = vrot.slane %v1661, 1
        %v1664 = vsel %vm1031, %v1659, %v1663
        %v1666 = vshrl.u32 %v1459, 16
        %v1668 = vshll.u32 %v1459, 16
        %v1670 = vrot.slane %v1668, 1
        %v1671 = vor.u32 %v1666, %v1670
        %v1673 = vshll.u32 %v1539, 16
        %v1675 = vrot.slane %v1673, 1
        %v1676 = vsel %vm1031, %v1671, %v1675
        %v1678 = vshrl.u32 %v1460, 16
        %v1680 = vshll.u32 %v1460, 16
        %v1682 = vrot.slane %v1680, 1
        %v1683 = vor.u32 %v1678, %v1682
        %v1685 = vshll.u32 %v1540, 16
        %v1687 = vrot.slane %v1685, 1
        %v1688 = vsel %vm1031, %v1683, %v1687
        %v1690 = vshrl.u32 %v1461, 16
        %v1692 = vshll.u32 %v1461, 16
        %v1694 = vrot.slane %v1692, 1
        %v1695 = vor.u32 %v1690, %v1694
        %v1697 = vshll.u32 %v1541, 16
        %v1699 = vrot.slane %v1697, 1
        %v1700 = vsel %vm1031, %v1695, %v1699
        %v1702 = vshrl.u32 %v1462, 16
        %v1704 = vshll.u32 %v1462, 16
        %v1706 = vrot.slane %v1704, 1
        %v1707 = vor.u32 %v1702, %v1706
        %v1709 = vshll.u32 %v1542, 16
        %v1711 = vrot.slane %v1709, 1
        %v1712 = vsel %vm1031, %v1707, %v1711
        %v1714 = vshrl.u32 %v1463, 16
        %v1716 = vshll.u32 %v1463, 16
        %v1718 = vrot.slane %v1716, 1
        %v1719 = vor.u32 %v1714, %v1718
        %v1721 = vshll.u32 %v1543, 16
        %v1723 = vrot.slane %v1721, 1
        %v1724 = vsel %vm1031, %v1719, %v1723
        %v1726 = vshrl.u32 %v1464, 16
        %v1728 = vshll.u32 %v1464, 16
        %v1730 = vrot.slane %v1728, 1
        %v1731 = vor.u32 %v1726, %v1730
        %v1733 = vshll.u32 %v1544, 16
        %v1735 = vrot.slane %v1733, 1
        %v1736 = vsel %vm1031, %v1731, %v1735
        %1737 = vrot.lane.b32.xlu0 %v1556, 16
        %v1738 = vpop.permute.xlu0 %1737
        %1739 = vrot.lane.b32.xlu0 %v1568, 16
        %v1740 = vpop.permute.xlu0 %1739
        %1741 = vrot.lane.b32.xlu0 %v1580, 16
        %v1742 = vpop.permute.xlu0 %1741
        %1743 = vrot.lane.b32.xlu0 %v1592, 16
        %v1744 = vpop.permute.xlu0 %1743
        %1745 = vrot.lane.b32.xlu0 %v1604, 16
        %v1746 = vpop.permute.xlu0 %1745
        %1747 = vrot.lane.b32.xlu0 %v1616, 16
        %v1748 = vpop.permute.xlu0 %1747
        %1749 = vrot.lane.b32.xlu0 %v1628, 16
        %v1750 = vpop.permute.xlu0 %1749
        %1751 = vrot.lane.b32.xlu0 %v1640, 16
        %v1752 = vpop.permute.xlu0 %1751
        %1753 = vrot.lane.b32.xlu0 %v1652, 16
        %v1754 = vpop.permute.xlu0 %1753
        %1755 = vrot.lane.b32.xlu0 %v1664, 16
        %v1756 = vpop.permute.xlu0 %1755
        %1757 = vrot.lane.b32.xlu0 %v1676, 16
        %v1758 = vpop.permute.xlu0 %1757
        %1759 = vrot.lane.b32.xlu0 %v1688, 16
        %v1760 = vpop.permute.xlu0 %1759
        %1761 = vrot.lane.b32.xlu0 %v1700, 16
        %v1762 = vpop.permute.xlu0 %1761
        %1763 = vrot.lane.b32.xlu0 %v1712, 16
        %v1764 = vpop.permute.xlu0 %1763
        %1765 = vrot.lane.b32.xlu0 %v1724, 16
        %v1766 = vpop.permute.xlu0 %1765
        %1767 = vrot.lane.b32.xlu0 %v1736, 16
        %v1768 = vpop.permute.xlu0 %1767
        %v1785 = vunpack.c.l.b16 %v822
        %v1786 = vunpack.c.l.b16 %v823
        %v1787 = vunpack.c.l.b16 %v824
        %v1788 = vunpack.c.l.b16 %v825
        %v1789 = vunpack.c.l.b16 %v826
        %v1790 = vunpack.c.l.b16 %v827
        %v1791 = vunpack.c.l.b16 %v828
        %v1792 = vunpack.c.l.b16 %v829
        %v1793 = vunpack.c.l.b16 %v830
        %v1794 = vunpack.c.l.b16 %v831
        %v1795 = vunpack.c.l.b16 %v832
        %v1796 = vunpack.c.l.b16 %v833
        %v1797 = vunpack.c.l.b16 %v834
        %v1798 = vunpack.c.l.b16 %v835
        %v1799 = vunpack.c.l.b16 %v836
        %v1800 = vunpack.c.l.b16 %v837
        %v1801 = vpack.c.b16 %v1418, %v1785
        %v1802 = vpack.c.b16 %v1420, %v1786
        %v1803 = vpack.c.b16 %v1422, %v1787
        %v1804 = vpack.c.b16 %v1424, %v1788
        %v1805 = vpack.c.b16 %v1426, %v1789
        %v1806 = vpack.c.b16 %v1428, %v1790
        %v1807 = vpack.c.b16 %v1430, %v1791
        %v1808 = vpack.c.b16 %v1432, %v1792
        %v1809 = vpack.c.b16 %v1434, %v1793
        %v1810 = vpack.c.b16 %v1436, %v1794
        %v1811 = vpack.c.b16 %v1438, %v1795
        %v1812 = vpack.c.b16 %v1440, %v1796
        %v1813 = vpack.c.b16 %v1442, %v1797
        %v1814 = vpack.c.b16 %v1444, %v1798
        %v1815 = vpack.c.b16 %v1446, %v1799
        %v1816 = vpack.c.b16 %v1448, %v1800
        %v1817 = vrot.slane %v1801, 1
        %v1818 = vrot.slane %v1529, 1
        %v1819 = vsel %vm1304, %v1817, %v1818
        %v1820 = vrot.slane %v1802, 1
        %v1821 = vrot.slane %v1530, 1
        %v1822 = vsel %vm1304, %v1820, %v1821
        %v1823 = vrot.slane %v1803, 1
        %v1824 = vrot.slane %v1531, 1
        %v1825 = vsel %vm1304, %v1823, %v1824
        %v1826 = vrot.slane %v1804, 1
        %v1827 = vrot.slane %v1532, 1
        %v1828 = vsel %vm1304, %v1826, %v1827
        %v1829 = vrot.slane %v1805, 1
        %v1830 = vrot.slane %v1533, 1
        %v1831 = vsel %vm1304, %v1829, %v1830
        %v1832 = vrot.slane %v1806, 1
        %v1833 = vrot.slane %v1534, 1
        %v1834 = vsel %vm1304, %v1832, %v1833
        %v1835 = vrot.slane %v1807, 1
        %v1836 = vrot.slane %v1535, 1
        %v1837 = vsel %vm1304, %v1835, %v1836
        %v1838 = vrot.slane %v1808, 1
        %v1839 = vrot.slane %v1536, 1
        %v1840 = vsel %vm1304, %v1838, %v1839
        %v1841 = vrot.slane %v1809, 1
        %v1842 = vrot.slane %v1537, 1
        %v1843 = vsel %vm1304, %v1841, %v1842
        %v1844 = vrot.slane %v1810, 1
        %v1845 = vrot.slane %v1538, 1
        %v1846 = vsel %vm1304, %v1844, %v1845
        %v1847 = vrot.slane %v1811, 1
        %v1848 = vrot.slane %v1539, 1
        %v1849 = vsel %vm1304, %v1847, %v1848
        %v1850 = vrot.slane %v1812, 1
        %v1851 = vrot.slane %v1540, 1
        %v1852 = vsel %vm1304, %v1850, %v1851
        %v1853 = vrot.slane %v1813, 1
        %v1854 = vrot.slane %v1541, 1
        %v1855 = vsel %vm1304, %v1853, %v1854
        %v1856 = vrot.slane %v1814, 1
        %v1857 = vrot.slane %v1542, 1
        %v1858 = vsel %vm1304, %v1856, %v1857
        %v1859 = vrot.slane %v1815, 1
        %v1860 = vrot.slane %v1543, 1
        %v1861 = vsel %vm1304, %v1859, %v1860
        %v1862 = vrot.slane %v1816, 1
        %v1863 = vrot.slane %v1544, 1
        %v1864 = vsel %vm1304, %v1862, %v1863
        %1865 = vrot.lane.b32.xlu0 %v1819, 20
        %v1866 = vpop.permute.xlu0 %1865
        %1867 = vrot.lane.b32.xlu0 %v1822, 20
        %v1868 = vpop.permute.xlu0 %1867
        %1869 = vrot.lane.b32.xlu0 %v1825, 20
        %v1870 = vpop.permute.xlu0 %1869
        %1871 = vrot.lane.b32.xlu0 %v1828, 20
        %v1872 = vpop.permute.xlu0 %1871
        %1873 = vrot.lane.b32.xlu0 %v1831, 20
        %v1874 = vpop.permute.xlu0 %1873
        %1875 = vrot.lane.b32.xlu0 %v1834, 20
        %v1876 = vpop.permute.xlu0 %1875
        %1877 = vrot.lane.b32.xlu0 %v1837, 20
        %v1878 = vpop.permute.xlu0 %1877
        %1879 = vrot.lane.b32.xlu0 %v1840, 20
        %v1880 = vpop.permute.xlu0 %1879
        %1881 = vrot.lane.b32.xlu0 %v1843, 20
        %v1882 = vpop.permute.xlu0 %1881
        %1883 = vrot.lane.b32.xlu0 %v1846, 20
        %v1884 = vpop.permute.xlu0 %1883
        %1885 = vrot.lane.b32.xlu0 %v1849, 20
        %v1886 = vpop.permute.xlu0 %1885
        %1887 = vrot.lane.b32.xlu0 %v1852, 20
        %v1888 = vpop.permute.xlu0 %1887
        %1889 = vrot.lane.b32.xlu0 %v1855, 20
        %v1890 = vpop.permute.xlu0 %1889
        %1891 = vrot.lane.b32.xlu0 %v1858, 20
        %v1892 = vpop.permute.xlu0 %1891
        %1893 = vrot.lane.b32.xlu0 %v1861, 20
        %v1894 = vpop.permute.xlu0 %1893
        %1895 = vrot.lane.b32.xlu0 %v1864, 20
        %v1896 = vpop.permute.xlu0 %1895
        %v1929 = vunpack.c.l.b16 %v839
        %v1930 = vunpack.c.l.b16 %v840
        %v1931 = vunpack.c.l.b16 %v841
        %v1932 = vunpack.c.l.b16 %v842
        %v1933 = vunpack.c.l.b16 %v843
        %v1934 = vunpack.c.l.b16 %v844
        %v1935 = vunpack.c.l.b16 %v845
        %v1936 = vunpack.c.l.b16 %v846
        %v1937 = vunpack.c.l.b16 %v847
        %v1938 = vunpack.c.l.b16 %v848
        %v1939 = vunpack.c.l.b16 %v849
        %v1940 = vunpack.c.l.b16 %v850
        %v1941 = vunpack.c.l.b16 %v851
        %v1942 = vunpack.c.l.b16 %v852
        %v1943 = vunpack.c.l.b16 %v853
        %v1944 = vunpack.c.l.b16 %v854
        %v1945 = vunpack.c.l.b16 %v855
        %v1946 = vunpack.c.l.b16 %v856
        %v1947 = vunpack.c.l.b16 %v857
        %v1948 = vunpack.c.l.b16 %v858
        %v1949 = vunpack.c.l.b16 %v859
        %v1950 = vunpack.c.l.b16 %v860
        %v1951 = vunpack.c.l.b16 %v861
        %v1952 = vunpack.c.l.b16 %v862
        %v1953 = vunpack.c.l.b16 %v863
        %v1954 = vunpack.c.l.b16 %v864
        %v1955 = vunpack.c.l.b16 %v865
        %v1956 = vunpack.c.l.b16 %v866
        %v1957 = vunpack.c.l.b16 %v867
        %v1958 = vunpack.c.l.b16 %v868
        %v1959 = vunpack.c.l.b16 %v869
        %v1960 = vunpack.c.l.b16 %v870
        %v1961 = vpack.c.b16 %v1930, %v1929
        %v1962 = vpack.c.b16 %v1932, %v1931
        %v1963 = vpack.c.b16 %v1934, %v1933
        %v1964 = vpack.c.b16 %v1936, %v1935
        %v1965 = vpack.c.b16 %v1938, %v1937
        %v1966 = vpack.c.b16 %v1940, %v1939
        %v1967 = vpack.c.b16 %v1942, %v1941
        %v1968 = vpack.c.b16 %v1944, %v1943
        %v1969 = vpack.c.b16 %v1946, %v1945
        %v1970 = vpack.c.b16 %v1948, %v1947
        %v1971 = vpack.c.b16 %v1950, %v1949
        %v1972 = vpack.c.b16 %v1952, %v1951
        %v1973 = vpack.c.b16 %v1954, %v1953
        %v1974 = vpack.c.b16 %v1956, %v1955
        %v1975 = vpack.c.b16 %v1958, %v1957
        %v1976 = vpack.c.b16 %v1960, %v1959
        %1977 = vrot.lane.b32.xlu0 %v1961, 24
        %v1978 = vpop.permute.xlu0 %1977
        %1979 = vrot.lane.b32.xlu0 %v1962, 24
        %v1980 = vpop.permute.xlu0 %1979
        %1981 = vrot.lane.b32.xlu0 %v1963, 24
        %v1982 = vpop.permute.xlu0 %1981
        %1983 = vrot.lane.b32.xlu0 %v1964, 24
        %v1984 = vpop.permute.xlu0 %1983
        %1985 = vrot.lane.b32.xlu0 %v1965, 24
        %v1986 = vpop.permute.xlu0 %1985
        %1987 = vrot.lane.b32.xlu0 %v1966, 24
        %v1988 = vpop.permute.xlu0 %1987
        %1989 = vrot.lane.b32.xlu0 %v1967, 24
        %v1990 = vpop.permute.xlu0 %1989
        %1991 = vrot.lane.b32.xlu0 %v1968, 24
        %v1992 = vpop.permute.xlu0 %1991
        %1993 = vrot.lane.b32.xlu0 %v1969, 24
        %v1994 = vpop.permute.xlu0 %1993
        %1995 = vrot.lane.b32.xlu0 %v1970, 24
        %v1996 = vpop.permute.xlu0 %1995
        %1997 = vrot.lane.b32.xlu0 %v1971, 24
        %v1998 = vpop.permute.xlu0 %1997
        %1999 = vrot.lane.b32.xlu0 %v1972, 24
        %v2000 = vpop.permute.xlu0 %1999
        %2001 = vrot.lane.b32.xlu0 %v1973, 24
        %v2002 = vpop.permute.xlu0 %2001
        %2003 = vrot.lane.b32.xlu0 %v1974, 24
        %v2004 = vpop.permute.xlu0 %2003
        %2005 = vrot.lane.b32.xlu0 %v1975, 24
        %v2006 = vpop.permute.xlu0 %2005
        %2007 = vrot.lane.b32.xlu0 %v1976, 24
        %v2008 = vpop.permute.xlu0 %2007
        %v2025 = vunpack.c.l.b16 %v871
        %v2026 = vunpack.c.l.b16 %v872
        %v2027 = vunpack.c.l.b16 %v873
        %v2028 = vunpack.c.l.b16 %v874
        %v2029 = vunpack.c.l.b16 %v875
        %v2030 = vunpack.c.l.b16 %v876
        %v2031 = vunpack.c.l.b16 %v877
        %v2032 = vunpack.c.l.b16 %v878
        %v2033 = vunpack.c.l.b16 %v879
        %v2034 = vunpack.c.l.b16 %v880
        %v2035 = vunpack.c.l.b16 %v881
        %v2036 = vunpack.c.l.b16 %v882
        %v2037 = vunpack.c.l.b16 %v883
        %v2038 = vunpack.c.l.b16 %v884
        %v2039 = vunpack.c.l.b16 %v885
        %v2040 = vunpack.c.l.b16 %v886
        %v2041 = vpack.c.b16 %v2025, %v2025
        %v2042 = vpack.c.b16 %v2026, %v2026
        %v2043 = vpack.c.b16 %v2027, %v2027
        %v2044 = vpack.c.b16 %v2028, %v2028
        %v2045 = vpack.c.b16 %v2029, %v2029
        %v2046 = vpack.c.b16 %v2030, %v2030
        %v2047 = vpack.c.b16 %v2031, %v2031
        %v2048 = vpack.c.b16 %v2032, %v2032
        %v2049 = vpack.c.b16 %v2033, %v2033
        %v2050 = vpack.c.b16 %v2034, %v2034
        %v2051 = vpack.c.b16 %v2035, %v2035
        %v2052 = vpack.c.b16 %v2036, %v2036
        %v2053 = vpack.c.b16 %v2037, %v2037
        %v2054 = vpack.c.b16 %v2038, %v2038
        %v2055 = vpack.c.b16 %v2039, %v2039
        %v2056 = vpack.c.b16 %v2040, %v2040
        %v2058 = vshrl.u32 %v1961, 16
        %v2060 = vshll.u32 %v1961, 16
        %v2062 = vrot.slane %v2060, 1
        %v2063 = vor.u32 %v2058, %v2062
        %v2065 = vshll.u32 %v2041, 16
        %v2067 = vrot.slane %v2065, 1
        %v2068 = vsel %vm1031, %v2063, %v2067
        %v2070 = vshrl.u32 %v1962, 16
        %v2072 = vshll.u32 %v1962, 16
        %v2074 = vrot.slane %v2072, 1
        %v2075 = vor.u32 %v2070, %v2074
        %v2077 = vshll.u32 %v2042, 16
        %v2079 = vrot.slane %v2077, 1
        %v2080 = vsel %vm1031, %v2075, %v2079
        %v2082 = vshrl.u32 %v1963, 16
        %v2084 = vshll.u32 %v1963, 16
        %v2086 = vrot.slane %v2084, 1
        %v2087 = vor.u32 %v2082, %v2086
        %v2089 = vshll.u32 %v2043, 16
        %v2091 = vrot.slane %v2089, 1
        %v2092 = vsel %vm1031, %v2087, %v2091
        %v2094 = vshrl.u32 %v1964, 16
        %v2096 = vshll.u32 %v1964, 16
        %v2098 = vrot.slane %v2096, 1
        %v2099 = vor.u32 %v2094, %v2098
        %v2101 = vshll.u32 %v2044, 16
        %v2103 = vrot.slane %v2101, 1
        %v2104 = vsel %vm1031, %v2099, %v2103
        %v2106 = vshrl.u32 %v1965, 16
        %v2108 = vshll.u32 %v1965, 16
        %v2110 = vrot.slane %v2108, 1
        %v2111 = vor.u32 %v2106, %v2110
        %v2113 = vshll.u32 %v2045, 16
        %v2115 = vrot.slane %v2113, 1
        %v2116 = vsel %vm1031, %v2111, %v2115
        %v2118 = vshrl.u32 %v1966, 16
        %v2120 = vshll.u32 %v1966, 16
        %v2122 = vrot.slane %v2120, 1
        %v2123 = vor.u32 %v2118, %v2122
        %v2125 = vshll.u32 %v2046, 16
        %v2127 = vrot.slane %v2125, 1
        %v2128 = vsel %vm1031, %v2123, %v2127
        %v2130 = vshrl.u32 %v1967, 16
        %v2132 = vshll.u32 %v1967, 16
        %v2134 = vrot.slane %v2132, 1
        %v2135 = vor.u32 %v2130, %v2134
        %v2137 = vshll.u32 %v2047, 16
        %v2139 = vrot.slane %v2137, 1
        %v2140 = vsel %vm1031, %v2135, %v2139
        %v2142 = vshrl.u32 %v1968, 16
        %v2144 = vshll.u32 %v1968, 16
        %v2146 = vrot.slane %v2144, 1
        %v2147 = vor.u32 %v2142, %v2146
        %v2149 = vshll.u32 %v2048, 16
        %v2151 = vrot.slane %v2149, 1
        %v2152 = vsel %vm1031, %v2147, %v2151
        %v2154 = vshrl.u32 %v1969, 16
        %v2156 = vshll.u32 %v1969, 16
        %v2158 = vrot.slane %v2156, 1
        %v2159 = vor.u32 %v2154, %v2158
        %v2161 = vshll.u32 %v2049, 16
        %v2163 = vrot.slane %v2161, 1
        %v2164 = vsel %vm1031, %v2159, %v2163
        %v2166 = vshrl.u32 %v1970, 16
        %v2168 = vshll.u32 %v1970, 16
        %v2170 = vrot.slane %v2168, 1
        %v2171 = vor.u32 %v2166, %v2170
        %v2173 = vshll.u32 %v2050, 16
        %v2175 = vrot.slane %v2173, 1
        %v2176 = vsel %vm1031, %v2171, %v2175
        %v2178 = vshrl.u32 %v1971, 16
        %v2180 = vshll.u32 %v1971, 16
        %v2182 = vrot.slane %v2180, 1
        %v2183 = vor.u32 %v2178, %v2182
        %v2185 = vshll.u32 %v2051, 16
        %v2187 = vrot.slane %v2185, 1
        %v2188 = vsel %vm1031, %v2183, %v2187
        %v2190 = vshrl.u32 %v1972, 16
        %v2192 = vshll.u32 %v1972, 16
        %v2194 = vrot.slane %v2192, 1
        %v2195 = vor.u32 %v2190, %v2194
        %v2197 = vshll.u32 %v2052, 16
        %v2199 = vrot.slane %v2197, 1
        %v2200 = vsel %vm1031, %v2195, %v2199
        %v2202 = vshrl.u32 %v1973, 16
        %v2204 = vshll.u32 %v1973, 16
        %v2206 = vrot.slane %v2204, 1
        %v2207 = vor.u32 %v2202, %v2206
        %v2209 = vshll.u32 %v2053, 16
        %v2211 = vrot.slane %v2209, 1
        %v2212 = vsel %vm1031, %v2207, %v2211
        %v2214 = vshrl.u32 %v1974, 16
        %v2216 = vshll.u32 %v1974, 16
        %v2218 = vrot.slane %v2216, 1
        %v2219 = vor.u32 %v2214, %v2218
        %v2221 = vshll.u32 %v2054, 16
        %v2223 = vrot.slane %v2221, 1
        %v2224 = vsel %vm1031, %v2219, %v2223
        %v2226 = vshrl.u32 %v1975, 16
        %v2228 = vshll.u32 %v1975, 16
        %v2230 = vrot.slane %v2228, 1
        %v2231 = vor.u32 %v2226, %v2230
        %v2233 = vshll.u32 %v2055, 16
        %v2235 = vrot.slane %v2233, 1
        %v2236 = vsel %vm1031, %v2231, %v2235
        %v2238 = vshrl.u32 %v1976, 16
        %v2240 = vshll.u32 %v1976, 16
        %v2242 = vrot.slane %v2240, 1
        %v2243 = vor.u32 %v2238, %v2242
        %v2245 = vshll.u32 %v2056, 16
        %v2247 = vrot.slane %v2245, 1
        %v2248 = vsel %vm1031, %v2243, %v2247
        %2249 = vrot.lane.b32.xlu0 %v2068, 28
        %v2250 = vpop.permute.xlu0 %2249
        %2251 = vrot.lane.b32.xlu0 %v2080, 28
        %v2252 = vpop.permute.xlu0 %2251
        %2253 = vrot.lane.b32.xlu0 %v2092, 28
        %v2254 = vpop.permute.xlu0 %2253
        %2255 = vrot.lane.b32.xlu0 %v2104, 28
        %v2256 = vpop.permute.xlu0 %2255
        %2257 = vrot.lane.b32.xlu0 %v2116, 28
        %v2258 = vpop.permute.xlu0 %2257
        %2259 = vrot.lane.b32.xlu0 %v2128, 28
        %v2260 = vpop.permute.xlu0 %2259
        %2261 = vrot.lane.b32.xlu0 %v2140, 28
        %v2262 = vpop.permute.xlu0 %2261
        %2263 = vrot.lane.b32.xlu0 %v2152, 28
        %v2264 = vpop.permute.xlu0 %2263
        %2265 = vrot.lane.b32.xlu0 %v2164, 28
        %v2266 = vpop.permute.xlu0 %2265
        %2267 = vrot.lane.b32.xlu0 %v2176, 28
        %v2268 = vpop.permute.xlu0 %2267
        %2269 = vrot.lane.b32.xlu0 %v2188, 28
        %v2270 = vpop.permute.xlu0 %2269
        %2271 = vrot.lane.b32.xlu0 %v2200, 28
        %v2272 = vpop.permute.xlu0 %2271
        %2273 = vrot.lane.b32.xlu0 %v2212, 28
        %v2274 = vpop.permute.xlu0 %2273
        %2275 = vrot.lane.b32.xlu0 %v2224, 28
        %v2276 = vpop.permute.xlu0 %2275
        %2277 = vrot.lane.b32.xlu0 %v2236, 28
        %v2278 = vpop.permute.xlu0 %2277
        %2279 = vrot.lane.b32.xlu0 %v2248, 28
        %v2280 = vpop.permute.xlu0 %2279
        %v2297 = vunpack.c.l.b16 %v887
        %v2298 = vunpack.c.l.b16 %v888
        %v2299 = vunpack.c.l.b16 %v889
        %v2300 = vunpack.c.l.b16 %v890
        %v2301 = vunpack.c.l.b16 %v891
        %v2302 = vunpack.c.l.b16 %v892
        %v2303 = vunpack.c.l.b16 %v893
        %v2304 = vunpack.c.l.b16 %v894
        %v2305 = vunpack.c.l.b16 %v895
        %v2306 = vunpack.c.l.b16 %v896
        %v2307 = vunpack.c.l.b16 %v897
        %v2308 = vunpack.c.l.b16 %v898
        %v2309 = vunpack.c.l.b16 %v899
        %v2310 = vunpack.c.l.b16 %v900
        %v2311 = vunpack.c.l.b16 %v901
        %v2312 = vunpack.c.l.b16 %v902
        %v2313 = vpack.c.b16 %v1930, %v2297
        %v2314 = vpack.c.b16 %v1932, %v2298
        %v2315 = vpack.c.b16 %v1934, %v2299
        %v2316 = vpack.c.b16 %v1936, %v2300
        %v2317 = vpack.c.b16 %v1938, %v2301
        %v2318 = vpack.c.b16 %v1940, %v2302
        %v2319 = vpack.c.b16 %v1942, %v2303
        %v2320 = vpack.c.b16 %v1944, %v2304
        %v2321 = vpack.c.b16 %v1946, %v2305
        %v2322 = vpack.c.b16 %v1948, %v2306
        %v2323 = vpack.c.b16 %v1950, %v2307
        %v2324 = vpack.c.b16 %v1952, %v2308
        %v2325 = vpack.c.b16 %v1954, %v2309
        %v2326 = vpack.c.b16 %v1956, %v2310
        %v2327 = vpack.c.b16 %v1958, %v2311
        %v2328 = vpack.c.b16 %v1960, %v2312
        %v2329 = vrot.slane %v2313, 1
        %v2330 = vrot.slane %v2041, 1
        %v2331 = vsel %vm1304, %v2329, %v2330
        %v2332 = vrot.slane %v2314, 1
        %v2333 = vrot.slane %v2042, 1
        %v2334 = vsel %vm1304, %v2332, %v2333
        %v2335 = vrot.slane %v2315, 1
        %v2336 = vrot.slane %v2043, 1
        %v2337 = vsel %vm1304, %v2335, %v2336
        %v2338 = vrot.slane %v2316, 1
        %v2339 = vrot.slane %v2044, 1
        %v2340 = vsel %vm1304, %v2338, %v2339
        %v2341 = vrot.slane %v2317, 1
        %v2342 = vrot.slane %v2045, 1
        %v2343 = vsel %vm1304, %v2341, %v2342
        %v2344 = vrot.slane %v2318, 1
        %v2345 = vrot.slane %v2046, 1
        %v2346 = vsel %vm1304, %v2344, %v2345
        %v2347 = vrot.slane %v2319, 1
        %v2348 = vrot.slane %v2047, 1
        %v2349 = vsel %vm1304, %v2347, %v2348
        %v2350 = vrot.slane %v2320, 1
        %v2351 = vrot.slane %v2048, 1
        %v2352 = vsel %vm1304, %v2350, %v2351
        %v2353 = vrot.slane %v2321, 1
        %v2354 = vrot.slane %v2049, 1
        %v2355 = vsel %vm1304, %v2353, %v2354
        %v2356 = vrot.slane %v2322, 1
        %v2357 = vrot.slane %v2050, 1
        %v2358 = vsel %vm1304, %v2356, %v2357
        %v2359 = vrot.slane %v2323, 1
        %v2360 = vrot.slane %v2051, 1
        %v2361 = vsel %vm1304, %v2359, %v2360
        %v2362 = vrot.slane %v2324, 1
        %v2363 = vrot.slane %v2052, 1
        %v2364 = vsel %vm1304, %v2362, %v2363
        %v2365 = vrot.slane %v2325, 1
        %v2366 = vrot.slane %v2053, 1
        %v2367 = vsel %vm1304, %v2365, %v2366
        %v2368 = vrot.slane %v2326, 1
        %v2369 = vrot.slane %v2054, 1
        %v2370 = vsel %vm1304, %v2368, %v2369
        %v2371 = vrot.slane %v2327, 1
        %v2372 = vrot.slane %v2055, 1
        %v2373 = vsel %vm1304, %v2371, %v2372
        %v2374 = vrot.slane %v2328, 1
        %v2375 = vrot.slane %v2056, 1
        %v2376 = vsel %vm1304, %v2374, %v2375
        %2377 = vrot.lane.b32.xlu0 %v2331, 32
        %v2378 = vpop.permute.xlu0 %2377
        %2379 = vrot.lane.b32.xlu0 %v2334, 32
        %v2380 = vpop.permute.xlu0 %2379
        %2381 = vrot.lane.b32.xlu0 %v2337, 32
        %v2382 = vpop.permute.xlu0 %2381
        %2383 = vrot.lane.b32.xlu0 %v2340, 32
        %v2384 = vpop.permute.xlu0 %2383
        %2385 = vrot.lane.b32.xlu0 %v2343, 32
        %v2386 = vpop.permute.xlu0 %2385
        %2387 = vrot.lane.b32.xlu0 %v2346, 32
        %v2388 = vpop.permute.xlu0 %2387
        %2389 = vrot.lane.b32.xlu0 %v2349, 32
        %v2390 = vpop.permute.xlu0 %2389
        %2391 = vrot.lane.b32.xlu0 %v2352, 32
        %v2392 = vpop.permute.xlu0 %2391
        %2393 = vrot.lane.b32.xlu0 %v2355, 32
        %v2394 = vpop.permute.xlu0 %2393
        %2395 = vrot.lane.b32.xlu0 %v2358, 32
        %v2396 = vpop.permute.xlu0 %2395
        %2397 = vrot.lane.b32.xlu0 %v2361, 32
        %v2398 = vpop.permute.xlu0 %2397
        %2399 = vrot.lane.b32.xlu0 %v2364, 32
        %v2400 = vpop.permute.xlu0 %2399
        %2401 = vrot.lane.b32.xlu0 %v2367, 32
        %v2402 = vpop.permute.xlu0 %2401
        %2403 = vrot.lane.b32.xlu0 %v2370, 32
        %v2404 = vpop.permute.xlu0 %2403
        %2405 = vrot.lane.b32.xlu0 %v2373, 32
        %v2406 = vpop.permute.xlu0 %2405
        %2407 = vrot.lane.b32.xlu0 %v2376, 32
        %v2408 = vpop.permute.xlu0 %2407
        %vm2409 = vcmask 31744
        %v2411 = vsel %vm2409, %v967, %v1225
        %v2413 = vsel %vm2409, %v968, %v1227
        %v2415 = vsel %vm2409, %v969, %v1229
        %v2417 = vsel %vm2409, %v970, %v1231
        %v2419 = vsel %vm2409, %v971, %v1233
        %v2421 = vsel %vm2409, %v972, %v1235
        %v2423 = vsel %vm2409, %v973, %v1237
        %v2425 = vsel %vm2409, %v974, %v1239
        %v2427 = vsel %vm2409, %v975, %v1241
        %v2429 = vsel %vm2409, %v976, %v1243
        %v2431 = vsel %vm2409, %v977, %v1245
        %v2433 = vsel %vm2409, %v978, %v1247
        %v2435 = vsel %vm2409, %v979, %v1249
        %v2437 = vsel %vm2409, %v980, %v1251
        %v2439 = vsel %vm2409, %v981, %v1253
        %v2441 = vsel %vm2409, %v982, %v1255
        %vm2442 = vcmask 64512
        %v2444 = vsel %vm2442, %v2411, %v1354
        %v2446 = vsel %vm2442, %v2413, %v1356
        %v2448 = vsel %vm2442, %v2415, %v1358
        %v2450 = vsel %vm2442, %v2417, %v1360
        %v2452 = vsel %vm2442, %v2419, %v1362
        %v2454 = vsel %vm2442, %v2421, %v1364
        %v2456 = vsel %vm2442, %v2423, %v1366
        %v2458 = vsel %vm2442, %v2425, %v1368
        %v2460 = vsel %vm2442, %v2427, %v1370
        %v2462 = vsel %vm2442, %v2429, %v1372
        %v2464 = vsel %vm2442, %v2431, %v1374
        %v2466 = vsel %vm2442, %v2433, %v1376
        %v2468 = vsel %vm2442, %v2435, %v1378
        %v2470 = vsel %vm2442, %v2437, %v1380
        %v2472 = vsel %vm2442, %v2439, %v1382
        %v2474 = vsel %vm2442, %v2441, %v1384
        %vm2475 = vcmask 97280
        %v2477 = vsel %vm2475, %v2444, %v1466
        %v2479 = vsel %vm2475, %v2446, %v1468
        %v2481 = vsel %vm2475, %v2448, %v1470
        %v2483 = vsel %vm2475, %v2450, %v1472
        %v2485 = vsel %vm2475, %v2452, %v1474
        %v2487 = vsel %vm2475, %v2454, %v1476
        %v2489 = vsel %vm2475, %v2456, %v1478
        %v2491 = vsel %vm2475, %v2458, %v1480
        %v2493 = vsel %vm2475, %v2460, %v1482
        %v2495 = vsel %vm2475, %v2462, %v1484
        %v2497 = vsel %vm2475, %v2464, %v1486
        %v2499 = vsel %vm2475, %v2466, %v1488
        %v2501 = vsel %vm2475, %v2468, %v1490
        %v2503 = vsel %vm2475, %v2470, %v1492
        %v2505 = vsel %vm2475, %v2472, %v1494
        %v2507 = vsel %vm2475, %v2474, %v1496
        %vm2508 = vcmask 130048
        %v2510 = vsel %vm2508, %v2477, %v1738
        %v2512 = vsel %vm2508, %v2479, %v1740
        %v2514 = vsel %vm2508, %v2481, %v1742
        %v2516 = vsel %vm2508, %v2483, %v1744
        %v2518 = vsel %vm2508, %v2485, %v1746
        %v2520 = vsel %vm2508, %v2487, %v1748
        %v2522 = vsel %vm2508, %v2489, %v1750
        %v2524 = vsel %vm2508, %v2491, %v1752
        %v2526 = vsel %vm2508, %v2493, %v1754
        %v2528 = vsel %vm2508, %v2495, %v1756
        %v2530 = vsel %vm2508, %v2497, %v1758
        %v2532 = vsel %vm2508, %v2499, %v1760
        %v2534 = vsel %vm2508, %v2501, %v1762
        %v2536 = vsel %vm2508, %v2503, %v1764
        %v2538 = vsel %vm2508, %v2505, %v1766
        %v2540 = vsel %vm2508, %v2507, %v1768
        %vm2541 = vcmask 162816
        %v2543 = vsel %vm2541, %v2510, %v1866
        %v2545 = vsel %vm2541, %v2512, %v1868
        %v2547 = vsel %vm2541, %v2514, %v1870
        %v2549 = vsel %vm2541, %v2516, %v1872
        %v2551 = vsel %vm2541, %v2518, %v1874
        %v2553 = vsel %vm2541, %v2520, %v1876
        %v2555 = vsel %vm2541, %v2522, %v1878
        %v2557 = vsel %vm2541, %v2524, %v1880
        %v2559 = vsel %vm2541, %v2526, %v1882
        %v2561 = vsel %vm2541, %v2528, %v1884
        %v2563 = vsel %vm2541, %v2530, %v1886
        %v2565 = vsel %vm2541, %v2532, %v1888
        %v2567 = vsel %vm2541, %v2534, %v1890
        %v2569 = vsel %vm2541, %v2536, %v1892
        %v2571 = vsel %vm2541, %v2538, %v1894
        %v2573 = vsel %vm2541, %v2540, %v1896
        %vm2574 = vcmask 195584
        %v2576 = vsel %vm2574, %v2543, %v1978
        %v2578 = vsel %vm2574, %v2545, %v1980
        %v2580 = vsel %vm2574, %v2547, %v1982
        %v2582 = vsel %vm2574, %v2549, %v1984
        %v2584 = vsel %vm2574, %v2551, %v1986
        %v2586 = vsel %vm2574, %v2553, %v1988
        %v2588 = vsel %vm2574, %v2555, %v1990
        %v2590 = vsel %vm2574, %v2557, %v1992
        %v2592 = vsel %vm2574, %v2559, %v1994
        %v2594 = vsel %vm2574, %v2561, %v1996
        %v2596 = vsel %vm2574, %v2563, %v1998
        %v2598 = vsel %vm2574, %v2565, %v2000
        %v2600 = vsel %vm2574, %v2567, %v2002
        %v2602 = vsel %vm2574, %v2569, %v2004
        %v2604 = vsel %vm2574, %v2571, %v2006
        %v2606 = vsel %vm2574, %v2573, %v2008
        %vm2607 = vcmask 228352
        %v2609 = vsel %vm2607, %v2576, %v2250
        %v2611 = vsel %vm2607, %v2578, %v2252
        %v2613 = vsel %vm2607, %v2580, %v2254
        %v2615 = vsel %vm2607, %v2582, %v2256
        %v2617 = vsel %vm2607, %v2584, %v2258
        %v2619 = vsel %vm2607, %v2586, %v2260
        %v2621 = vsel %vm2607, %v2588, %v2262
        %v2623 = vsel %vm2607, %v2590, %v2264
        %v2625 = vsel %vm2607, %v2592, %v2266
        %v2627 = vsel %vm2607, %v2594, %v2268
        %v2629 = vsel %vm2607, %v2596, %v2270
        %v2631 = vsel %vm2607, %v2598, %v2272
        %v2633 = vsel %vm2607, %v2600, %v2274
        %v2635 = vsel %vm2607, %v2602, %v2276
        %v2637 = vsel %vm2607, %v2604, %v2278
        %v2639 = vsel %vm2607, %v2606, %v2280
        %vm2640 = vcmask 261120
        %v2642 = vsel %vm2640, %v2609, %v2378
        %v2644 = vsel %vm2640, %v2611, %v2380
        %v2646 = vsel %vm2640, %v2613, %v2382
        %v2648 = vsel %vm2640, %v2615, %v2384
        %v2650 = vsel %vm2640, %v2617, %v2386
        %v2652 = vsel %vm2640, %v2619, %v2388
        %v2654 = vsel %vm2640, %v2621, %v2390
        %v2656 = vsel %vm2640, %v2623, %v2392
        %v2658 = vsel %vm2640, %v2625, %v2394
        %v2660 = vsel %vm2640, %v2627, %v2396
        %v2662 = vsel %vm2640, %v2629, %v2398
        %v2664 = vsel %vm2640, %v2631, %v2400
        %v2666 = vsel %vm2640, %v2633, %v2402
        %v2668 = vsel %vm2640, %v2635, %v2404
        %v2670 = vsel %vm2640, %v2637, %v2406
        %v2672 = vsel %vm2640, %v2639, %v2408
        %v2673 = vld [vmem:[%s1] sm:$0xf]
        %v2674 = vld [vmem:[%s1 + $0x4] sm:$0xf]
        %v2675 = vld [vmem:[%s1 + $0x8] sm:$0xf]
        %v2676 = vld [vmem:[%s1 + $0xc] sm:$0xf]
        %v2677 = vld [vmem:[%s1 + $0x10] sm:$0x3]
        %v2683 = vunpack.c.l.b16 %v2673
        %v2684 = vunpack.c.l.b16 %v2674
        %v2685 = vunpack.c.l.b16 %v2675
        %v2686 = vunpack.c.l.b16 %v2676
        %v2687 = vunpack.c.l.b16 %v2677
        %v2688 = vpack.c.b16 %v2684, %v2683
        %v2689 = vpack.c.b16 %v2686, %v2685
        %v2690 = vpack.c.b16 %v2687, %v2687
        %vm2693 = vcmask 293888
        %v2694 = vsel %vm2693, %v2642, 0
        %v2696 = vsel %vm2693, %v2644, 0
        %v2698 = vsel %vm2693, %v2646, 0
        %v2700 = vsel %vm2693, %v2648, 0
        %v2702 = vsel %vm2693, %v2650, 0
        %v2704 = vsel %vm2693, %v2652, 0
        %v2706 = vsel %vm2693, %v2654, 0
        %v2708 = vsel %vm2693, %v2656, 0
        %v2710 = vsel %vm2693, %v2658, 0
        %v2712 = vsel %vm2693, %v2660, 0
        %v2714 = vsel %vm2693, %v2662, 0
        %v2716 = vsel %vm2693, %v2664, 0
        %v2718 = vsel %vm2693, %v2666, 0
        %v2720 = vsel %vm2693, %v2668, 0
        %v2722 = vsel %vm2693, %v2670, 0
        %v2724 = vsel %vm2693, %v2672, 0
        %vm2726 = vcmask 1041408
        %v2728 = vsel %vm2726, %v2690, 0
        %2730 = vmatprep.subr.bf16.mxu0 0
        %2731 = vmatpush1.bf16.msra.mxu0 %v2688
        %2732 = vmatprep.subr.bf16.mxu0 0
        %2733 = vmatpush1.bf16.msra.mxu0 %v2689
        %2734 = vmatprep.subr.bf16.mxu0 0
        %2735 = vmatpush1.bf16.msra.mxu0 %v2728
        %2736 = vmatprep.subr.bf16.mxu0 0
        %2737 = vmatpush1.bf16.msra.mxu0 0
        %2738 = vmatprep.subr.bf16.mxu0 0
        %2739 = vmatpush1.bf16.msra.mxu0 0
        %2740 = vmatprep.subr.bf16.mxu0 0
        %2741 = vmatpush1.bf16.msra.mxu0 0
        %2742 = vmatprep.subr.bf16.mxu0 0
        %2743 = vmatpush1.bf16.msra.mxu0 0
        %2744 = vmatprep.subr.bf16.mxu0 0
        %2745 = vmatpush1.bf16.msra.mxu0 0
        %2746 = vmatprep.subr.bf16.mxu0 0
        %2747 = vmatpush1.bf16.msra.mxu0 0
        %2748 = vmatprep.subr.bf16.mxu0 0
        %2749 = vmatpush1.bf16.msra.mxu0 0
        %2750 = vmatprep.subr.bf16.mxu0 0
        %2751 = vmatpush1.bf16.msra.mxu0 0
        %2752 = vmatprep.subr.bf16.mxu0 0
        %2753 = vmatpush1.bf16.msra.mxu0 0
        %2754 = vmatprep.subr.bf16.mxu0 0
        %2755 = vmatpush1.bf16.msra.mxu0 0
        %2756 = vmatprep.subr.bf16.mxu0 0
        %2757 = vmatpush1.bf16.msra.mxu0 0
        %2758 = vmatprep.subr.bf16.mxu0 0
        %2759 = vmatpush1.bf16.msra.mxu0 0
        %2760 = vmatprep.subr.bf16.mxu0 0
        %2761 = vmatpush1.bf16.msra.mxu0 0
        %2762 = vmatprep.mubr.bf16.mxu0 0
        %2763 = vmatmul.mubr.bf16.gmra.mrb[0].mxu0 %v2694
        %v2764 = vpop.f32.mrb[0].mxu0
        %v2765 = vadd.f32 0.0, %v2764
        %v2766 = vpop.f32.mrb[0].mxu0
        %v2767 = vpop.f32.mrb[0].mxu0
        %v2768 = vadd.f32 0.0, %v2767
        %v2769 = vpop.f32.mrb[0].mxu0
        %2770 = vmatprep.mubr.bf16.mxu0 0
        %2771 = vmatmul.mubr.bf16.gmra.mrb[0].mxu0 %v2696
        %v2772 = vpop.f32.mrb[0].mxu0
        %v2773 = vadd.f32 0.0, %v2772
        %v2774 = vpop.f32.mrb[0].mxu0
        %v2775 = vpop.f32.mrb[0].mxu0
        %v2776 = vadd.f32 0.0, %v2775
        %v2777 = vpop.f32.mrb[0].mxu0
        %2778 = vmatprep.mubr.bf16.mxu0 0
        %2779 = vmatmul.mubr.bf16.gmra.mrb[0].mxu0 %v2698
        %v2780 = vpop.f32.mrb[0].mxu0
        %v2781 = vadd.f32 0.0, %v2780
        %v2782 = vpop.f32.mrb[0].mxu0
        %v2783 = vpop.f32.mrb[0].mxu0
        %v2784 = vadd.f32 0.0, %v2783
        %v2785 = vpop.f32.mrb[0].mxu0
        %2786 = vmatprep.mubr.bf16.mxu0 0
        %2787 = vmatmul.mubr.bf16.gmra.mrb[0].mxu0 %v2700
        %v2788 = vpop.f32.mrb[0].mxu0
        %v2789 = vadd.f32 0.0, %v2788
        %v2790 = vpop.f32.mrb[0].mxu0
        %v2791 = vpop.f32.mrb[0].mxu0
        %v2792 = vadd.f32 0.0, %v2791
        %v2793 = vpop.f32.mrb[0].mxu0
        %2794 = vmatprep.mubr.bf16.mxu0 0
        %2795 = vmatmul.mubr.bf16.gmra.mrb[0].mxu0 %v2702
        %v2796 = vpop.f32.mrb[0].mxu0
        %v2797 = vadd.f32 0.0, %v2796
        %v2798 = vpop.f32.mrb[0].mxu0
        %v2799 = vpop.f32.mrb[0].mxu0
        %v2800 = vadd.f32 0.0, %v2799
        %v2801 = vpop.f32.mrb[0].mxu0
        %2802 = vmatprep.mubr.bf16.mxu0 0
        %2803 = vmatmul.mubr.bf16.gmra.mrb[0].mxu0 %v2704
        %v2804 = vpop.f32.mrb[0].mxu0
        %v2805 = vadd.f32 0.0, %v2804
        %v2806 = vpop.f32.mrb[0].mxu0
        %v2807 = vpop.f32.mrb[0].mxu0
        %v2808 = vadd.f32 0.0, %v2807
        %v2809 = vpop.f32.mrb[0].mxu0
        %2810 = vmatprep.mubr.bf16.mxu0 0
        %2811 = vmatmul.mubr.bf16.gmra.mrb[0].mxu0 %v2706
        %v2812 = vpop.f32.mrb[0].mxu0
        %v2813 = vadd.f32 0.0, %v2812
        %v2814 = vpop.f32.mrb[0].mxu0
        %v2815 = vpop.f32.mrb[0].mxu0
        %v2816 = vadd.f32 0.0, %v2815
        %v2817 = vpop.f32.mrb[0].mxu0
        %2818 = vmatprep.mubr.bf16.mxu0 0
        %2819 = vmatmul.mubr.bf16.gmra.mrb[0].mxu0 %v2708
        %v2820 = vpop.f32.mrb[0].mxu0
        %v2821 = vadd.f32 0.0, %v2820
        %v2822 = vpop.f32.mrb[0].mxu0
        %v2823 = vpop.f32.mrb[0].mxu0
        %v2824 = vadd.f32 0.0, %v2823
        %v2825 = vpop.f32.mrb[0].mxu0
        %2826 = vmatprep.mubr.bf16.mxu0 0
        %2827 = vmatmul.mubr.bf16.gmra.mrb[0].mxu0 %v2710
        %v2828 = vpop.f32.mrb[0].mxu0
        %v2829 = vadd.f32 0.0, %v2828
        %v2830 = vpop.f32.mrb[0].mxu0
        %v2831 = vpop.f32.mrb[0].mxu0
        %v2832 = vadd.f32 0.0, %v2831
        %v2833 = vpop.f32.mrb[0].mxu0
        %2834 = vmatprep.mubr.bf16.mxu0 0
        %2835 = vmatmul.mubr.bf16.gmra.mrb[0].mxu0 %v2712
        %v2836 = vpop.f32.mrb[0].mxu0
        %v2837 = vadd.f32 0.0, %v2836
        %v2838 = vpop.f32.mrb[0].mxu0
        %v2839 = vpop.f32.mrb[0].mxu0
        %v2840 = vadd.f32 0.0, %v2839
        %v2841 = vpop.f32.mrb[0].mxu0
        %2842 = vmatprep.mubr.bf16.mxu0 0
        %2843 = vmatmul.mubr.bf16.gmra.mrb[0].mxu0 %v2714
        %v2844 = vpop.f32.mrb[0].mxu0
        %v2845 = vadd.f32 0.0, %v2844
        %v2846 = vpop.f32.mrb[0].mxu0
        %v2847 = vpop.f32.mrb[0].mxu0
        %v2848 = vadd.f32 0.0, %v2847
        %v2849 = vpop.f32.mrb[0].mxu0
        %2850 = vmatprep.mubr.bf16.mxu0 0
        %2851 = vmatmul.mubr.bf16.gmra.mrb[0].mxu0 %v2716
        %v2852 = vpop.f32.mrb[0].mxu0
        %v2853 = vadd.f32 0.0, %v2852
        %v2854 = vpop.f32.mrb[0].mxu0
        %v2855 = vpop.f32.mrb[0].mxu0
        %v2856 = vadd.f32 0.0, %v2855
        %v2857 = vpop.f32.mrb[0].mxu0
        %2858 = vmatprep.mubr.bf16.mxu0 0
        %2859 = vmatmul.mubr.bf16.gmra.mrb[0].mxu0 %v2718
        %v2860 = vpop.f32.mrb[0].mxu0
        %v2861 = vadd.f32 0.0, %v2860
        %v2862 = vpop.f32.mrb[0].mxu0
        %v2863 = vpop.f32.mrb[0].mxu0
        %v2864 = vadd.f32 0.0, %v2863
        %v2865 = vpop.f32.mrb[0].mxu0
        %2866 = vmatprep.mubr.bf16.mxu0 0
        %2867 = vmatmul.mubr.bf16.gmra.mrb[0].mxu0 %v2720
        %v2868 = vpop.f32.mrb[0].mxu0
        %v2869 = vadd.f32 0.0, %v2868
        %v2870 = vpop.f32.mrb[0].mxu0
        %v2871 = vpop.f32.mrb[0].mxu0
        %v2872 = vadd.f32 0.0, %v2871
        %v2873 = vpop.f32.mrb[0].mxu0
        %2874 = vmatprep.mubr.bf16.mxu0 0
        %2875 = vmatmul.mubr.bf16.gmra.mrb[0].mxu0 %v2722
        %v2876 = vpop.f32.mrb[0].mxu0
        %v2877 = vadd.f32 0.0, %v2876
        %v2878 = vpop.f32.mrb[0].mxu0
        %v2879 = vpop.f32.mrb[0].mxu0
        %v2880 = vadd.f32 0.0, %v2879
        %v2881 = vpop.f32.mrb[0].mxu0
        %2882 = vmatprep.mubr.bf16.mxu0 0
        %2883 = vmatmul.mubr.bf16.gmra.mrb[0].mxu0 %v2724
        %v2884 = vpop.f32.mrb[0].mxu0
        %v2885 = vadd.f32 0.0, %v2884
        %v2886 = vpop.f32.mrb[0].mxu0
        %v2887 = vpop.f32.mrb[0].mxu0
        %v2888 = vadd.f32 0.0, %v2887
        %v2889 = vpop.f32.mrb[0].mxu0
        %2890 = vdwg.mxu0
        %2891 = vst [vmem:[%s167] sm:$0xff] %v2765
        %2892 = vst [vmem:[%s167 + $0x8] sm:$0xff] %v2768
        %2893 = vst [vmem:[%s167 + $0x10] sm:$0xff] %v2773
        %2894 = vst [vmem:[%s167 + $0x18] sm:$0xff] %v2776
        %2895 = vst [vmem:[%s167 + $0x20] sm:$0xff] %v2781
        %2896 = vst [vmem:[%s167 + $0x28] sm:$0xff] %v2784
        %2897 = vst [vmem:[%s167 + $0x30] sm:$0xff] %v2789
        %2898 = vst [vmem:[%s167 + $0x38] sm:$0xff] %v2792
        %2899 = vst [vmem:[%s167 + $0x40] sm:$0xff] %v2797
        %2900 = vst [vmem:[%s167 + $0x48] sm:$0xff] %v2800
        %2901 = vst [vmem:[%s167 + $0x50] sm:$0xff] %v2805
        %2902 = vst [vmem:[%s167 + $0x58] sm:$0xff] %v2808
        %2903 = vst [vmem:[%s167 + $0x60] sm:$0xff] %v2813
        %2904 = vst [vmem:[%s167 + $0x68] sm:$0xff] %v2816
        %2905 = vst [vmem:[%s167 + $0x70] sm:$0xff] %v2821
        %2906 = vst [vmem:[%s167 + $0x78] sm:$0xff] %v2824
        %2907 = vst [vmem:[%s167 + $0x80] sm:$0xff] %v2829
        %2908 = vst [vmem:[%s167 + $0x88] sm:$0xff] %v2832
        %2909 = vst [vmem:[%s167 + $0x90] sm:$0xff] %v2837
        %2910 = vst [vmem:[%s167 + $0x98] sm:$0xff] %v2840
        %2911 = vst [vmem:[%s167 + $0xa0] sm:$0xff] %v2845
        %2912 = vst [vmem:[%s167 + $0xa8] sm:$0xff] %v2848
        %2913 = vst [vmem:[%s167 + $0xb0] sm:$0xff] %v2853
        %2914 = vst [vmem:[%s167 + $0xb8] sm:$0xff] %v2856
        %2915 = vst [vmem:[%s167 + $0xc0] sm:$0xff] %v2861
        %2916 = vst [vmem:[%s167 + $0xc8] sm:$0xff] %v2864
        %2917 = vst [vmem:[%s167 + $0xd0] sm:$0xff] %v2869
        %2918 = vst [vmem:[%s167 + $0xd8] sm:$0xff] %v2872
        %2919 = vst [vmem:[%s167 + $0xe0] sm:$0xff] %v2877
        %2920 = vst [vmem:[%s167 + $0xe8] sm:$0xff] %v2880
        %2921 = vst [vmem:[%s167 + $0xf0] sm:$0xff] %v2885
        %2922 = vst [vmem:[%s167 + $0xf8] sm:$0xff] %v2888
        %v2923 = vadd.f32 %v2765, %v2768
        %v2924 = vadd.f32 %v2923, %v2773
        %v2925 = vadd.f32 %v2924, %v2776
        %v2926 = vadd.f32 %v2925, %v2781
        %v2927 = vadd.f32 %v2926, %v2784
        %v2928 = vadd.f32 %v2927, %v2789
        %v2929 = vadd.f32 %v2928, %v2792
        %v2930 = vadd.f32 %v2929, %v2797
        %v2931 = vadd.f32 %v2930, %v2800
        %v2932 = vadd.f32 %v2931, %v2805
        %v2933 = vadd.f32 %v2932, %v2808
        %v2934 = vadd.f32 %v2933, %v2813
        %v2935 = vadd.f32 %v2934, %v2816
        %v2936 = vadd.f32 %v2935, %v2821
        %v2937 = vadd.f32 %v2936, %v2824
        %v2938 = vadd.f32 %v2937, %v2829
        %v2939 = vadd.f32 %v2938, %v2832
        %v2940 = vadd.f32 %v2939, %v2837
        %v2941 = vadd.f32 %v2940, %v2840
        %v2942 = vadd.f32 %v2941, %v2845
        %v2943 = vadd.f32 %v2942, %v2848
        %v2944 = vadd.f32 %v2943, %v2853
        %v2945 = vadd.f32 %v2944, %v2856
        %v2946 = vadd.f32 %v2945, %v2861
        %v2947 = vadd.f32 %v2946, %v2864
        %v2948 = vadd.f32 %v2947, %v2869
        %v2949 = vadd.f32 %v2948, %v2872
        %v2950 = vadd.f32 %v2949, %v2877
        %v2951 = vadd.f32 %v2950, %v2880
        %v2952 = vadd.f32 %v2951, %v2885
        %v2953 = vadd.f32 %v2952, %v2888
        %v2954 = vrot.slane %v2953, 4
        %v2955 = vadd.f32 %v2953, %v2954
        %v2956 = vrot.slane %v2955, 2
        %v2957 = vadd.f32 %v2955, %v2956
        %v2958 = vrot.slane %v2957, 1
        %v2959 = vadd.f32 %v2957, %v2958
        %v2960 = vmul.f32 %v2765, %v2765
        %v2961 = vmul.f32 %v2768, %v2768
        %v2962 = vmul.f32 %v2773, %v2773
        %v2963 = vmul.f32 %v2776, %v2776
        %v2964 = vmul.f32 %v2781, %v2781
        %v2965 = vmul.f32 %v2784, %v2784
        %v2966 = vmul.f32 %v2789, %v2789
        %v2967 = vmul.f32 %v2792, %v2792
        %v2968 = vmul.f32 %v2797, %v2797
        %v2969 = vmul.f32 %v2800, %v2800
        %v2970 = vmul.f32 %v2805, %v2805
        %v2971 = vmul.f32 %v2808, %v2808
        %v2972 = vmul.f32 %v2813, %v2813
        %v2973 = vmul.f32 %v2816, %v2816
        %v2974 = vmul.f32 %v2821, %v2821
        %v2975 = vmul.f32 %v2824, %v2824
        %v2976 = vmul.f32 %v2829, %v2829
        %v2977 = vmul.f32 %v2832, %v2832
        %v2978 = vmul.f32 %v2837, %v2837
        %v2979 = vmul.f32 %v2840, %v2840
        %v2980 = vmul.f32 %v2845, %v2845
        %v2981 = vmul.f32 %v2848, %v2848
        %v2982 = vmul.f32 %v2853, %v2853
        %v2983 = vmul.f32 %v2856, %v2856
        %v2984 = vmul.f32 %v2861, %v2861
        %v2985 = vmul.f32 %v2864, %v2864
        %v2986 = vmul.f32 %v2869, %v2869
        %v2987 = vmul.f32 %v2872, %v2872
        %v2988 = vmul.f32 %v2877, %v2877
        %v2989 = vmul.f32 %v2880, %v2880
        %v2990 = vmul.f32 %v2885, %v2885
        %v2991 = vmul.f32 %v2888, %v2888
        %v2992 = vadd.f32 %v2960, %v2961
        %v2993 = vadd.f32 %v2992, %v2962
        %v2994 = vadd.f32 %v2993, %v2963
        %v2995 = vadd.f32 %v2994, %v2964
        %v2996 = vadd.f32 %v2995, %v2965
        %v2997 = vadd.f32 %v2996, %v2966
        %v2998 = vadd.f32 %v2997, %v2967
        %v2999 = vadd.f32 %v2998, %v2968
        %v3000 = vadd.f32 %v2999, %v2969
        %v3001 = vadd.f32 %v3000, %v2970
        %v3002 = vadd.f32 %v3001, %v2971
        %v3003 = vadd.f32 %v3002, %v2972
        %v3004 = vadd.f32 %v3003, %v2973
        %v3005 = vadd.f32 %v3004, %v2974
        %v3006 = vadd.f32 %v3005, %v2975
        %v3007 = vadd.f32 %v3006, %v2976
        %v3008 = vadd.f32 %v3007, %v2977
        %v3009 = vadd.f32 %v3008, %v2978
        %v3010 = vadd.f32 %v3009, %v2979
        %v3011 = vadd.f32 %v3010, %v2980
        %v3012 = vadd.f32 %v3011, %v2981
        %v3013 = vadd.f32 %v3012, %v2982
        %v3014 = vadd.f32 %v3013, %v2983
        %v3015 = vadd.f32 %v3014, %v2984
        %v3016 = vadd.f32 %v3015, %v2985
        %v3017 = vadd.f32 %v3016, %v2986
        %v3018 = vadd.f32 %v3017, %v2987
        %v3019 = vadd.f32 %v3018, %v2988
        %v3020 = vadd.f32 %v3019, %v2989
        %v3021 = vadd.f32 %v3020, %v2990
        %v3022 = vadd.f32 %v3021, %v2991
        %v3023 = vrot.slane %v3022, 4
        %v3024 = vadd.f32 %v3022, %v3023
        %v3025 = vrot.slane %v3024, 2
        %v3026 = vadd.f32 %v3024, %v3025
        %v3027 = vrot.slane %v3026, 1
        %v3028 = vadd.f32 %v3026, %v3027
        %vm3029 = vcmask 1040384
        %v3030 = vsel %vm3029, %v2959, %v3028
        %3031 = vst [vmem:[%s174] sm:$0x3] %v3030
        %s3032 = sand.u32 %s76, 1
        %s3033 = scalar_lea.sflag [#allocation4], %s3032
        %s3034 = sand.u32 %s76, 1
        %s3035 = smul.addr %s3034, 256
        %s3036 = scalar_lea.vmem [#allocation3], %s3035
        %s3037 = sand.u32 %s102, 1
        %s3038 = scalar_lea.sflag [#allocation6], %s3037
        %s3039 = sand.u32 %s102, 1
        %s3040 = smul.addr %s3039, 2
        %s3041 = scalar_lea.vmem [#allocation5], %s3040
        // Predicated region
        $region29: #{tpu_custom_call.1} parent=27 // pred_check
          %p3042 = pneg %p86
        $region30: #{tpu_custom_call.1} parent=27 // pred_check_branch
          %3044 = sbr.rel (%p3042) target = $region32
        $region31: #{tpu_custom_call.1} parent=27 // pred_region
          %s3046 = ssub.s32 4096, 4096
          %3047 = vsyncadd %s3033, %s3046
          %s3048 = smul.addr %s21, 32
          %s3049 = smul.addr %s3048, 128
          %s3050 = scalar_lea.hbm %s2, %s3049
          %s3051 = sshll.u32 %s3036, 4
          %s3052 = int_to_ptr.vmem [resolvable:$true] %s3051
          %3057 = dma.vmem_to_hbm [thread:$0]  %s3052, 4096, %s3050, %s3033, 128, 128, 8
        $region32: #{tpu_custom_call.1} parent=27 // pred_fallthru
          _
        // Predicated region
        $region33: #{tpu_custom_call.1} parent=27 // pred_check
          %p3058 = pneg %p112
        $region34: #{tpu_custom_call.1} parent=27 // pred_check_branch
          %3060 = sbr.rel (%p3058) target = $region36
        $region35: #{tpu_custom_call.1} parent=27 // pred_region
          %s3062 = ssub.s32 32, 32
          %3063 = vsyncadd %s3038, %s3062
          %s3064 = smul.addr %s21, 32
          %s3065 = scalar_lea.hbm %s3, %s3064
          %s3067 = sshll.u32 %s3041, 4
          %s3068 = int_to_ptr.vmem [resolvable:$true] %s3067
          %3070 = dma.vmem_to_hbm [thread:$0]  %s3068, 32, %s3065, %s3038
        $region36: #{tpu_custom_call.1} parent=27 // pred_fallthru
          _
      $region28: #{tpu_custom_call.1} parent=5 // pred_fallthru
        _
      %p3071 = scmp.le.s32.totalorder 2, %s16
      // Predicated region
      $region37: #{tpu_custom_call.1} parent=5 // pred_check
        %p3072 = pneg %p3071
      $region38: #{tpu_custom_call.1} parent=5 // pred_check_branch
        %3074 = sbr.rel (%p3072) target = $region40
      $region39: #{tpu_custom_call.1} parent=5 // pred_region
        %s3075 = ssub.s32 %s16, 2
        // Predicated region
        $region41: #{tpu_custom_call.1} parent=39 // pred_check
          %p3076 = pneg %p92
        $region42: #{tpu_custom_call.1} parent=39 // pred_check_branch
          %3078 = sbr.rel (%p3076) target = $region44
        $region43: #{tpu_custom_call.1} parent=39 // pred_region
          %s3079 = sand.u32 %s77, 1
          %s3080 = scalar_lea.sflag [#allocation4], %s3079
          %s3081 = sand.u32 %s77, 1
          %s3082 = smul.addr %s3081, 256
          %s3083 = scalar_lea.vmem [#allocation3], %s3082
          %3084 = dma.done %s3080, 4096
        $region44: #{tpu_custom_call.1} parent=39 // pred_fallthru
          _
        // Predicated region
        $region45: #{tpu_custom_call.1} parent=39 // pred_check
          %p3085 = pneg %p118
        $region46: #{tpu_custom_call.1} parent=39 // pred_check_branch
          %3087 = sbr.rel (%p3085) target = $region48
        $region47: #{tpu_custom_call.1} parent=39 // pred_region
          %s3088 = sand.u32 %s103, 1
          %s3089 = scalar_lea.sflag [#allocation6], %s3088
          %s3090 = sand.u32 %s103, 1
          %s3091 = smul.addr %s3090, 2
          %s3092 = scalar_lea.vmem [#allocation5], %s3091
          %3093 = dma.done %s3089, 32
        $region48: #{tpu_custom_call.1} parent=39 // pred_fallthru
          _
      $region40: #{tpu_custom_call.1} parent=5 // pred_fallthru
        _
    $region6: #{tpu_custom_call.1} parent=1 // loop_footer
      %s20 = sadd.s32 1, %s16
    $region7: #{tpu_custom_call.1} parent=1 // loop_footer_branch
      %15 = sbr.rel target = $region3
    $region8: #{tpu_custom_call.1} parent=1 // loop_exit
      _
    %3094 = vsyncpa [#allocation4], 1
    %s3095 = scalar_lea.sflag [#allocation4], 1
    %3096 = vsyncpa %s3095, 1
    %3097 = vsyncpa [#allocation6], 1
    %s3098 = scalar_lea.sflag [#allocation6], 1
    %3099 = vsyncpa %s3098, 1

</llo_original>
